<compile_context>
chip_gen: v5e
topology: v5e:2x2
jax: 0.10.0
libtpu: 0.0.40
codegen_flags: <defaults>
</compile_context>

<pallas_src>
import jax
import jax.numpy as jnp
from jax.experimental import pallas as pl
from jax.experimental.pallas import tpu as pltpu


def _mlp_kernel(w1_ref, b1_ref, w2_ref, b2_ref, w3_ref, b3_ref, x_ref, o_ref):
    """Packed-batch MLP.

    x_ref:  [in_ch, TR, C]   VMEM  (batch packed over sublanes x lanes)
    o_ref:  [TR, C]          VMEM
    w*/b*:  flattened 1-D f32 in SMEM (scalar path -> VPU splats)
    """
    in_ch = x_ref.shape[0]
    mid_ch = b1_ref.shape[0]
    tr = o_ref.shape[0]
    SR = 8                       # sublane-sized inner chunk
    n_chunks = tr // SR          # static

    # Hoist all weight scalars out of the chunk loop (loop-invariant).
    w1 = [[w1_ref[o * in_ch + k] for k in range(in_ch)] for o in range(mid_ch)]
    b1 = [b1_ref[o] for o in range(mid_ch)]
    w2 = [[w2_ref[o * mid_ch + k] for k in range(mid_ch)] for o in range(mid_ch)]
    b2 = [b2_ref[o] for o in range(mid_ch)]
    w3 = [w3_ref[o] for o in range(mid_ch)]
    b3 = b3_ref[0]

    @pl.loop(0, n_chunks)
    def _(r):
        row = pl.multiple_of(r * SR, SR)
        xs = [x_ref[k, pl.ds(row, SR), :] for k in range(in_ch)]   # in_ch x [SR, C]

        # Layer 1: in_ch -> mid_ch, ReLU  (scalar-splat FMAs, pure VPU).
        h1 = []
        for o in range(mid_ch):
            acc = w1[o][0] * xs[0]
            for k in range(1, in_ch):
                acc = acc + w1[o][k] * xs[k]
            h1.append(jnp.maximum(acc + b1[o], 0.0))

        # Layer 2 (mid -> mid, ReLU) fused with layer 3 (mid -> 1) accumulation,
        # so each h2 channel dies immediately (low vreg pressure).
        out = None
        for o in range(mid_ch):
            acc = w2[o][0] * h1[0]
            for k in range(1, mid_ch):
                acc = acc + w2[o][k] * h1[k]
            h2o = jnp.maximum(acc + b2[o], 0.0)
            term = w3[o] * h2o
            out = term if out is None else out + term

        o_ref[pl.ds(row, SR), :] = out + b3


def my_ufunc_one_d(x, w1, b1, w2, b2, w3, b3, *, lane_width=512, max_tile_rows=512):
    """x: [B, in_ch] float32 -> [B, 1] float32 (torch-layout weights)."""
    B, in_ch = x.shape
    mid_ch = w1.shape[0]

    C = lane_width
    assert C % 128 == 0

    # Rows of the packed [R, C] batch view; round up to sublane multiple (8).
    rows = pl.cdiv(B, C)
    rows8 = max(8, ((rows + 7) // 8) * 8)

    # Tile rows: multiple of 8; aim for >=2 grid steps once the batch is
    # non-trivial (so v7x's two TensorCores both get work), cap at
    # max_tile_rows (~1 MiB input tile -> ~4 MiB double-buffered VMEM).
    if rows8 <= 8:
        tile_rows = 8
    elif rows8 <= max_tile_rows:
        tile_rows = ((rows8 + 15) // 16) * 8
    else:
        tile_rows = max_tile_rows
    r_pad = pl.cdiv(rows8, tile_rows) * tile_rows
    b_pad = r_pad * C

    # Lane/sublane-dense packing.  For in_ch == 1 the transpose is a free
    # reshape; only the final partial tile is zero-padded.
    xT = x.astype(jnp.float32).T                         # [in_ch, B]
    if b_pad != B:
        xT = jnp.pad(xT, ((0, 0), (0, b_pad - B)))
    x_packed = xT.reshape(in_ch, r_pad, C)

    # Flattened f32 weights/biases for the SMEM scalar path.
    w1f = jnp.asarray(w1, jnp.float32).reshape(-1)       # [mid_ch*in_ch]
    b1f = jnp.asarray(b1, jnp.float32).reshape(-1)       # [mid_ch]
    w2f = jnp.asarray(w2, jnp.float32).reshape(-1)       # [mid_ch*mid_ch]
    b2f = jnp.asarray(b2, jnp.float32).reshape(-1)       # [mid_ch]
    w3f = jnp.asarray(w3, jnp.float32).reshape(-1)       # [mid_ch]
    b3f = jnp.asarray(b3, jnp.float32).reshape(-1)       # [1]

    smem = pl.BlockSpec(memory_space=pltpu.MemorySpace.SMEM)

    flops = 2 * b_pad * (in_ch * mid_ch + mid_ch * mid_ch + mid_ch)
    bytes_accessed = 4 * (in_ch * b_pad + b_pad
                          + w1f.size + w2f.size + w3f.size
                          + b1f.size + b2f.size + b3f.size)

    out_packed = pl.pallas_call(
        _mlp_kernel,
        out_shape=jax.ShapeDtypeStruct((r_pad, C), jnp.float32),
        grid=(r_pad // tile_rows,),
        in_specs=[
            smem, smem, smem, smem, smem, smem,                       # weights/biases
            pl.BlockSpec((in_ch, tile_rows, C), lambda i: (0, i, 0)),  # packed x
        ],
        out_specs=pl.BlockSpec((tile_rows, C), lambda i: (i, 0)),      # packed out
        compiler_params=pltpu.CompilerParams(
            dimension_semantics=("parallel",)),
        cost_estimate=pl.CostEstimate(flops=flops, transcendentals=0,
                                      bytes_accessed=bytes_accessed),
    )(w1f, b1f, w2f, b2f, w3f, b3f, x_packed)

    # Strip padding, restore the original [B, 1] layout (reshape, no transpose).
    return out_packed.reshape(b_pad)[:B].reshape(B, 1)


def reference_mlp(x, w1, b1, w2, b2, w3, b3):
    h1 = jnp.maximum(x @ w1.T + b1, 0.0)
    h2 = jnp.maximum(h1 @ w2.T + b2, 0.0)
    return h2 @ w3.T + b3


if __name__ == "__main__":
    key = jax.random.PRNGKey(0)
    k_x, k1, k2, k3, k_big = jax.random.split(key, 5)

    in_ch, mid_ch, batch = 1, 8, 8
    x = jax.random.normal(k_x, (batch, in_ch), dtype=jnp.float32)
    # nn.init.normal_(mean=0, std=1) on weights, zeros on biases (torch layout).
    w1 = jax.random.normal(k1, (mid_ch, in_ch), dtype=jnp.float32)
    b1 = jnp.zeros((mid_ch,), dtype=jnp.float32)
    w2 = jax.random.normal(k2, (mid_ch, mid_ch), dtype=jnp.float32)
    b2 = jnp.zeros((mid_ch,), dtype=jnp.float32)
    w3 = jax.random.normal(k3, (1, mid_ch), dtype=jnp.float32)
    b3 = jnp.zeros((1,), dtype=jnp.float32)

    out = jax.block_until_ready(my_ufunc_one_d(x, w1, b1, w2, b2, w3, b3))
    ref = reference_mlp(x, w1, b1, w2, b2, w3, b3)
    assert out.shape == (batch, 1), out.shape
    assert jnp.allclose(out, ref, atol=1e-5, rtol=1e-5), (out, ref)

    # Larger, non-multiple batch: exercises tail padding, multi-step grid and
    # the inner chunk loop.
    big_b = 70000
    xb = jax.random.normal(k_big, (big_b, in_ch), dtype=jnp.float32)
    outb = jax.block_until_ready(my_ufunc_one_d(xb, w1, b1, w2, b2, w3, b3))
    refb = reference_mlp(xb, w1, b1, w2, b2, w3, b3)
    assert outb.shape == (big_b, 1), outb.shape
    assert jnp.allclose(outb, refb, atol=1e-4, rtol=1e-4)

    print("KERNEL_OK")
</pallas_src>

<mosaic_0001>
module attributes {stable_mosaic.version = 11 : i64} {
  func.func @_mlp_kernel(%arg0: i32, %arg1: memref<8xf32, #tpu.memory_space<smem>>, %arg2: memref<8xf32, #tpu.memory_space<smem>>, %arg3: memref<64xf32, #tpu.memory_space<smem>>, %arg4: memref<8xf32, #tpu.memory_space<smem>>, %arg5: memref<8xf32, #tpu.memory_space<smem>>, %arg6: memref<1xf32, #tpu.memory_space<smem>>, %arg7: memref<1x8x512xf32, #tpu.memory_space<vmem>>, %arg8: memref<8x512xf32, #tpu.memory_space<vmem>>) attributes {dimension_semantics = [#tpu.dimension_semantics<parallel>], iteration_bounds = array<i64: 1>, scalar_prefetch = 0 : i64, scratch_operands = 0 : i64, tpu.core_type = #tpu.core_type<tc>, window_params = [{transform_indices = @transform_0, window_bounds = array<i64: 8>}, {transform_indices = @transform_1, window_bounds = array<i64: 8>}, {transform_indices = @transform_2, window_bounds = array<i64: 64>}, {transform_indices = @transform_3, window_bounds = array<i64: 8>}, {transform_indices = @transform_4, window_bounds = array<i64: 8>}, {transform_indices = @transform_5, window_bounds = array<i64: 1>}, {transform_indices = @transform_6, window_bounds = array<i64: 1, 8, 512>}, {transform_indices = @transform_7, window_bounds = array<i64: 8, 512>}]} {
    %c0 = arith.constant 0 : index
    %0 = memref.load %arg1[%c0] : memref<8xf32, #tpu.memory_space<smem>>
    %c1 = arith.constant 1 : index
    %1 = memref.load %arg1[%c1] : memref<8xf32, #tpu.memory_space<smem>>
    %c2 = arith.constant 2 : index
    %2 = memref.load %arg1[%c2] : memref<8xf32, #tpu.memory_space<smem>>
    %c3 = arith.constant 3 : index
    %3 = memref.load %arg1[%c3] : memref<8xf32, #tpu.memory_space<smem>>
    %c4 = arith.constant 4 : index
    %4 = memref.load %arg1[%c4] : memref<8xf32, #tpu.memory_space<smem>>
    %c5 = arith.constant 5 : index
    %5 = memref.load %arg1[%c5] : memref<8xf32, #tpu.memory_space<smem>>
    %c6 = arith.constant 6 : index
    %6 = memref.load %arg1[%c6] : memref<8xf32, #tpu.memory_space<smem>>
    %c7 = arith.constant 7 : index
    %7 = memref.load %arg1[%c7] : memref<8xf32, #tpu.memory_space<smem>>
    %c0_0 = arith.constant 0 : index
    %8 = memref.load %arg2[%c0_0] : memref<8xf32, #tpu.memory_space<smem>>
    %c1_1 = arith.constant 1 : index
    %9 = memref.load %arg2[%c1_1] : memref<8xf32, #tpu.memory_space<smem>>
    %c2_2 = arith.constant 2 : index
    %10 = memref.load %arg2[%c2_2] : memref<8xf32, #tpu.memory_space<smem>>
    %c3_3 = arith.constant 3 : index
    %11 = memref.load %arg2[%c3_3] : memref<8xf32, #tpu.memory_space<smem>>
    %c4_4 = arith.constant 4 : index
    %12 = memref.load %arg2[%c4_4] : memref<8xf32, #tpu.memory_space<smem>>
    %c5_5 = arith.constant 5 : index
    %13 = memref.load %arg2[%c5_5] : memref<8xf32, #tpu.memory_space<smem>>
    %c6_6 = arith.constant 6 : index
    %14 = memref.load %arg2[%c6_6] : memref<8xf32, #tpu.memory_space<smem>>
    %c7_7 = arith.constant 7 : index
    %15 = memref.load %arg2[%c7_7] : memref<8xf32, #tpu.memory_space<smem>>
    %c0_8 = arith.constant 0 : index
    %16 = memref.load %arg3[%c0_8] : memref<64xf32, #tpu.memory_space<smem>>
    %c1_9 = arith.constant 1 : index
    %17 = memref.load %arg3[%c1_9] : memref<64xf32, #tpu.memory_space<smem>>
    %c2_10 = arith.constant 2 : index
    %18 = memref.load %arg3[%c2_10] : memref<64xf32, #tpu.memory_space<smem>>
    %c3_11 = arith.constant 3 : index
    %19 = memref.load %arg3[%c3_11] : memref<64xf32, #tpu.memory_space<smem>>
    %c4_12 = arith.constant 4 : index
    %20 = memref.load %arg3[%c4_12] : memref<64xf32, #tpu.memory_space<smem>>
    %c5_13 = arith.constant 5 : index
    %21 = memref.load %arg3[%c5_13] : memref<64xf32, #tpu.memory_space<smem>>
    %c6_14 = arith.constant 6 : index
    %22 = memref.load %arg3[%c6_14] : memref<64xf32, #tpu.memory_space<smem>>
    %c7_15 = arith.constant 7 : index
    %23 = memref.load %arg3[%c7_15] : memref<64xf32, #tpu.memory_space<smem>>
    %c8 = arith.constant 8 : index
    %24 = memref.load %arg3[%c8] : memref<64xf32, #tpu.memory_space<smem>>
    %c9 = arith.constant 9 : index
    %25 = memref.load %arg3[%c9] : memref<64xf32, #tpu.memory_space<smem>>
    %c10 = arith.constant 10 : index
    %26 = memref.load %arg3[%c10] : memref<64xf32, #tpu.memory_space<smem>>
    %c11 = arith.constant 11 : index
    %27 = memref.load %arg3[%c11] : memref<64xf32, #tpu.memory_space<smem>>
    %c12 = arith.constant 12 : index
    %28 = memref.load %arg3[%c12] : memref<64xf32, #tpu.memory_space<smem>>
    %c13 = arith.constant 13 : index
    %29 = memref.load %arg3[%c13] : memref<64xf32, #tpu.memory_space<smem>>
    %c14 = arith.constant 14 : index
    %30 = memref.load %arg3[%c14] : memref<64xf32, #tpu.memory_space<smem>>
    %c15 = arith.constant 15 : index
    %31 = memref.load %arg3[%c15] : memref<64xf32, #tpu.memory_space<smem>>
    %c16 = arith.constant 16 : index
    %32 = memref.load %arg3[%c16] : memref<64xf32, #tpu.memory_space<smem>>
    %c17 = arith.constant 17 : index
    %33 = memref.load %arg3[%c17] : memref<64xf32, #tpu.memory_space<smem>>
    %c18 = arith.constant 18 : index
    %34 = memref.load %arg3[%c18] : memref<64xf32, #tpu.memory_space<smem>>
    %c19 = arith.constant 19 : index
    %35 = memref.load %arg3[%c19] : memref<64xf32, #tpu.memory_space<smem>>
    %c20 = arith.constant 20 : index
    %36 = memref.load %arg3[%c20] : memref<64xf32, #tpu.memory_space<smem>>
    %c21 = arith.constant 21 : index
    %37 = memref.load %arg3[%c21] : memref<64xf32, #tpu.memory_space<smem>>
    %c22 = arith.constant 22 : index
    %38 = memref.load %arg3[%c22] : memref<64xf32, #tpu.memory_space<smem>>
    %c23 = arith.constant 23 : index
    %39 = memref.load %arg3[%c23] : memref<64xf32, #tpu.memory_space<smem>>
    %c24 = arith.constant 24 : index
    %40 = memref.load %arg3[%c24] : memref<64xf32, #tpu.memory_space<smem>>
    %c25 = arith.constant 25 : index
    %41 = memref.load %arg3[%c25] : memref<64xf32, #tpu.memory_space<smem>>
    %c26 = arith.constant 26 : index
    %42 = memref.load %arg3[%c26] : memref<64xf32, #tpu.memory_space<smem>>
    %c27 = arith.constant 27 : index
    %43 = memref.load %arg3[%c27] : memref<64xf32, #tpu.memory_space<smem>>
    %c28 = arith.constant 28 : index
    %44 = memref.load %arg3[%c28] : memref<64xf32, #tpu.memory_space<smem>>
    %c29 = arith.constant 29 : index
    %45 = memref.load %arg3[%c29] : memref<64xf32, #tpu.memory_space<smem>>
    %c30 = arith.constant 30 : index
    %46 = memref.load %arg3[%c30] : memref<64xf32, #tpu.memory_space<smem>>
    %c31 = arith.constant 31 : index
    %47 = memref.load %arg3[%c31] : memref<64xf32, #tpu.memory_space<smem>>
    %c32 = arith.constant 32 : index
    %48 = memref.load %arg3[%c32] : memref<64xf32, #tpu.memory_space<smem>>
    %c33 = arith.constant 33 : index
    %49 = memref.load %arg3[%c33] : memref<64xf32, #tpu.memory_space<smem>>
    %c34 = arith.constant 34 : index
    %50 = memref.load %arg3[%c34] : memref<64xf32, #tpu.memory_space<smem>>
    %c35 = arith.constant 35 : index
    %51 = memref.load %arg3[%c35] : memref<64xf32, #tpu.memory_space<smem>>
    %c36 = arith.constant 36 : index
    %52 = memref.load %arg3[%c36] : memref<64xf32, #tpu.memory_space<smem>>
    %c37 = arith.constant 37 : index
    %53 = memref.load %arg3[%c37] : memref<64xf32, #tpu.memory_space<smem>>
    %c38 = arith.constant 38 : index
    %54 = memref.load %arg3[%c38] : memref<64xf32, #tpu.memory_space<smem>>
    %c39 = arith.constant 39 : index
    %55 = memref.load %arg3[%c39] : memref<64xf32, #tpu.memory_space<smem>>
    %c40 = arith.constant 40 : index
    %56 = memref.load %arg3[%c40] : memref<64xf32, #tpu.memory_space<smem>>
    %c41 = arith.constant 41 : index
    %57 = memref.load %arg3[%c41] : memref<64xf32, #tpu.memory_space<smem>>
    %c42 = arith.constant 42 : index
    %58 = memref.load %arg3[%c42] : memref<64xf32, #tpu.memory_space<smem>>
    %c43 = arith.constant 43 : index
    %59 = memref.load %arg3[%c43] : memref<64xf32, #tpu.memory_space<smem>>
    %c44 = arith.constant 44 : index
    %60 = memref.load %arg3[%c44] : memref<64xf32, #tpu.memory_space<smem>>
    %c45 = arith.constant 45 : index
    %61 = memref.load %arg3[%c45] : memref<64xf32, #tpu.memory_space<smem>>
    %c46 = arith.constant 46 : index
    %62 = memref.load %arg3[%c46] : memref<64xf32, #tpu.memory_space<smem>>
    %c47 = arith.constant 47 : index
    %63 = memref.load %arg3[%c47] : memref<64xf32, #tpu.memory_space<smem>>
    %c48 = arith.constant 48 : index
    %64 = memref.load %arg3[%c48] : memref<64xf32, #tpu.memory_space<smem>>
    %c49 = arith.constant 49 : index
    %65 = memref.load %arg3[%c49] : memref<64xf32, #tpu.memory_space<smem>>
    %c50 = arith.constant 50 : index
    %66 = memref.load %arg3[%c50] : memref<64xf32, #tpu.memory_space<smem>>
    %c51 = arith.constant 51 : index
    %67 = memref.load %arg3[%c51] : memref<64xf32, #tpu.memory_space<smem>>
    %c52 = arith.constant 52 : index
    %68 = memref.load %arg3[%c52] : memref<64xf32, #tpu.memory_space<smem>>
    %c53 = arith.constant 53 : index
    %69 = memref.load %arg3[%c53] : memref<64xf32, #tpu.memory_space<smem>>
    %c54 = arith.constant 54 : index
    %70 = memref.load %arg3[%c54] : memref<64xf32, #tpu.memory_space<smem>>
    %c55 = arith.constant 55 : index
    %71 = memref.load %arg3[%c55] : memref<64xf32, #tpu.memory_space<smem>>
    %c56 = arith.constant 56 : index
    %72 = memref.load %arg3[%c56] : memref<64xf32, #tpu.memory_space<smem>>
    %c57 = arith.constant 57 : index
    %73 = memref.load %arg3[%c57] : memref<64xf32, #tpu.memory_space<smem>>
    %c58 = arith.constant 58 : index
    %74 = memref.load %arg3[%c58] : memref<64xf32, #tpu.memory_space<smem>>
    %c59 = arith.constant 59 : index
    %75 = memref.load %arg3[%c59] : memref<64xf32, #tpu.memory_space<smem>>
    %c60 = arith.constant 60 : index
    %76 = memref.load %arg3[%c60] : memref<64xf32, #tpu.memory_space<smem>>
    %c61 = arith.constant 61 : index
    %77 = memref.load %arg3[%c61] : memref<64xf32, #tpu.memory_space<smem>>
    %c62 = arith.constant 62 : index
    %78 = memref.load %arg3[%c62] : memref<64xf32, #tpu.memory_space<smem>>
    %c63 = arith.constant 63 : index
    %79 = memref.load %arg3[%c63] : memref<64xf32, #tpu.memory_space<smem>>
    %c0_16 = arith.constant 0 : index
    %80 = memref.load %arg4[%c0_16] : memref<8xf32, #tpu.memory_space<smem>>
    %c1_17 = arith.constant 1 : index
    %81 = memref.load %arg4[%c1_17] : memref<8xf32, #tpu.memory_space<smem>>
    %c2_18 = arith.constant 2 : index
    %82 = memref.load %arg4[%c2_18] : memref<8xf32, #tpu.memory_space<smem>>
    %c3_19 = arith.constant 3 : index
    %83 = memref.load %arg4[%c3_19] : memref<8xf32, #tpu.memory_space<smem>>
    %c4_20 = arith.constant 4 : index
    %84 = memref.load %arg4[%c4_20] : memref<8xf32, #tpu.memory_space<smem>>
    %c5_21 = arith.constant 5 : index
    %85 = memref.load %arg4[%c5_21] : memref<8xf32, #tpu.memory_space<smem>>
    %c6_22 = arith.constant 6 : index
    %86 = memref.load %arg4[%c6_22] : memref<8xf32, #tpu.memory_space<smem>>
    %c7_23 = arith.constant 7 : index
    %87 = memref.load %arg4[%c7_23] : memref<8xf32, #tpu.memory_space<smem>>
    %c0_24 = arith.constant 0 : index
    %88 = memref.load %arg5[%c0_24] : memref<8xf32, #tpu.memory_space<smem>>
    %c1_25 = arith.constant 1 : index
    %89 = memref.load %arg5[%c1_25] : memref<8xf32, #tpu.memory_space<smem>>
    %c2_26 = arith.constant 2 : index
    %90 = memref.load %arg5[%c2_26] : memref<8xf32, #tpu.memory_space<smem>>
    %c3_27 = arith.constant 3 : index
    %91 = memref.load %arg5[%c3_27] : memref<8xf32, #tpu.memory_space<smem>>
    %c4_28 = arith.constant 4 : index
    %92 = memref.load %arg5[%c4_28] : memref<8xf32, #tpu.memory_space<smem>>
    %c5_29 = arith.constant 5 : index
    %93 = memref.load %arg5[%c5_29] : memref<8xf32, #tpu.memory_space<smem>>
    %c6_30 = arith.constant 6 : index
    %94 = memref.load %arg5[%c6_30] : memref<8xf32, #tpu.memory_space<smem>>
    %c7_31 = arith.constant 7 : index
    %95 = memref.load %arg5[%c7_31] : memref<8xf32, #tpu.memory_space<smem>>
    %c0_32 = arith.constant 0 : index
    %96 = memref.load %arg6[%c0_32] : memref<1xf32, #tpu.memory_space<smem>>
    %c0_i32 = arith.constant 0 : i32
    %c1_i32 = arith.constant 1 : i32
    %97 = arith.muli %c0_i32, %c1_i32 : i32
    %c0_i32_33 = arith.constant 0 : i32
    %98 = arith.addi %c0_i32_33, %97 : i32
    %c8_i32 = arith.constant 8 : i32
    %99 = arith.muli %98, %c8_i32 : i32
    %100 = tpu.assume_multiple %99, 8 : i32
    %c0_34 = arith.constant 0 : index
    %101 = arith.index_cast %100 : i32 to index
    %c0_35 = arith.constant 0 : index
    %102 = vector.load %arg7[%c0_34, %101, %c0_35] : memref<1x8x512xf32, #tpu.memory_space<vmem>>, vector<1x8x512xf32>
    %103 = vector.shape_cast %102 : vector<1x8x512xf32> to vector<8x512xf32>
    %104 = vector.broadcast %0 : f32 to vector<8x512xf32>
    %105 = arith.mulf %104, %103 : vector<8x512xf32>
    %106 = vector.broadcast %8 : f32 to vector<8x512xf32>
    %107 = arith.addf %105, %106 : vector<8x512xf32>
    %cst = arith.constant 0.000000e+00 : f32
    %108 = vector.broadcast %cst : f32 to vector<8x512xf32>
    %109 = arith.maximumf %107, %108 : vector<8x512xf32>
    %110 = vector.broadcast %1 : f32 to vector<8x512xf32>
    %111 = arith.mulf %110, %103 : vector<8x512xf32>
    %112 = vector.broadcast %9 : f32 to vector<8x512xf32>
    %113 = arith.addf %111, %112 : vector<8x512xf32>
    %cst_36 = arith.constant 0.000000e+00 : f32
    %114 = vector.broadcast %cst_36 : f32 to vector<8x512xf32>
    %115 = arith.maximumf %113, %114 : vector<8x512xf32>
    %116 = vector.broadcast %2 : f32 to vector<8x512xf32>
    %117 = arith.mulf %116, %103 : vector<8x512xf32>
    %118 = vector.broadcast %10 : f32 to vector<8x512xf32>
    %119 = arith.addf %117, %118 : vector<8x512xf32>
    %cst_37 = arith.constant 0.000000e+00 : f32
    %120 = vector.broadcast %cst_37 : f32 to vector<8x512xf32>
    %121 = arith.maximumf %119, %120 : vector<8x512xf32>
    %122 = vector.broadcast %3 : f32 to vector<8x512xf32>
    %123 = arith.mulf %122, %103 : vector<8x512xf32>
    %124 = vector.broadcast %11 : f32 to vector<8x512xf32>
    %125 = arith.addf %123, %124 : vector<8x512xf32>
    %cst_38 = arith.constant 0.000000e+00 : f32
    %126 = vector.broadcast %cst_38 : f32 to vector<8x512xf32>
    %127 = arith.maximumf %125, %126 : vector<8x512xf32>
    %128 = vector.broadcast %4 : f32 to vector<8x512xf32>
    %129 = arith.mulf %128, %103 : vector<8x512xf32>
    %130 = vector.broadcast %12 : f32 to vector<8x512xf32>
    %131 = arith.addf %129, %130 : vector<8x512xf32>
    %cst_39 = arith.constant 0.000000e+00 : f32
    %132 = vector.broadcast %cst_39 : f32 to vector<8x512xf32>
    %133 = arith.maximumf %131, %132 : vector<8x512xf32>
    %134 = vector.broadcast %5 : f32 to vector<8x512xf32>
    %135 = arith.mulf %134, %103 : vector<8x512xf32>
    %136 = vector.broadcast %13 : f32 to vector<8x512xf32>
    %137 = arith.addf %135, %136 : vector<8x512xf32>
    %cst_40 = arith.constant 0.000000e+00 : f32
    %138 = vector.broadcast %cst_40 : f32 to vector<8x512xf32>
    %139 = arith.maximumf %137, %138 : vector<8x512xf32>
    %140 = vector.broadcast %6 : f32 to vector<8x512xf32>
    %141 = arith.mulf %140, %103 : vector<8x512xf32>
    %142 = vector.broadcast %14 : f32 to vector<8x512xf32>
    %143 = arith.addf %141, %142 : vector<8x512xf32>
    %cst_41 = arith.constant 0.000000e+00 : f32
    %144 = vector.broadcast %cst_41 : f32 to vector<8x512xf32>
    %145 = arith.maximumf %143, %144 : vector<8x512xf32>
    %146 = vector.broadcast %7 : f32 to vector<8x512xf32>
    %147 = arith.mulf %146, %103 : vector<8x512xf32>
    %148 = vector.broadcast %15 : f32 to vector<8x512xf32>
    %149 = arith.addf %147, %148 : vector<8x512xf32>
    %cst_42 = arith.constant 0.000000e+00 : f32
    %150 = vector.broadcast %cst_42 : f32 to vector<8x512xf32>
    %151 = arith.maximumf %149, %150 : vector<8x512xf32>
    %152 = vector.broadcast %16 : f32 to vector<8x512xf32>
    %153 = arith.mulf %152, %109 : vector<8x512xf32>
    %154 = vector.broadcast %17 : f32 to vector<8x512xf32>
    %155 = arith.mulf %154, %115 : vector<8x512xf32>
    %156 = arith.addf %153, %155 : vector<8x512xf32>
    %157 = vector.broadcast %18 : f32 to vector<8x512xf32>
    %158 = arith.mulf %157, %121 : vector<8x512xf32>
    %159 = arith.addf %156, %158 : vector<8x512xf32>
    %160 = vector.broadcast %19 : f32 to vector<8x512xf32>
    %161 = arith.mulf %160, %127 : vector<8x512xf32>
    %162 = arith.addf %159, %161 : vector<8x512xf32>
    %163 = vector.broadcast %20 : f32 to vector<8x512xf32>
    %164 = arith.mulf %163, %133 : vector<8x512xf32>
    %165 = arith.addf %162, %164 : vector<8x512xf32>
    %166 = vector.broadcast %21 : f32 to vector<8x512xf32>
    %167 = arith.mulf %166, %139 : vector<8x512xf32>
    %168 = arith.addf %165, %167 : vector<8x512xf32>
    %169 = vector.broadcast %22 : f32 to vector<8x512xf32>
    %170 = arith.mulf %169, %145 : vector<8x512xf32>
    %171 = arith.addf %168, %170 : vector<8x512xf32>
    %172 = vector.broadcast %23 : f32 to vector<8x512xf32>
    %173 = arith.mulf %172, %151 : vector<8x512xf32>
    %174 = arith.addf %171, %173 : vector<8x512xf32>
    %175 = vector.broadcast %80 : f32 to vector<8x512xf32>
    %176 = arith.addf %174, %175 : vector<8x512xf32>
    %cst_43 = arith.constant 0.000000e+00 : f32
    %177 = vector.broadcast %cst_43 : f32 to vector<8x512xf32>
    %178 = arith.maximumf %176, %177 : vector<8x512xf32>
    %179 = vector.broadcast %88 : f32 to vector<8x512xf32>
    %180 = arith.mulf %179, %178 : vector<8x512xf32>
    %181 = vector.broadcast %24 : f32 to vector<8x512xf32>
    %182 = arith.mulf %181, %109 : vector<8x512xf32>
    %183 = vector.broadcast %25 : f32 to vector<8x512xf32>
    %184 = arith.mulf %183, %115 : vector<8x512xf32>
    %185 = arith.addf %182, %184 : vector<8x512xf32>
    %186 = vector.broadcast %26 : f32 to vector<8x512xf32>
    %187 = arith.mulf %186, %121 : vector<8x512xf32>
    %188 = arith.addf %185, %187 : vector<8x512xf32>
    %189 = vector.broadcast %27 : f32 to vector<8x512xf32>
    %190 = arith.mulf %189, %127 : vector<8x512xf32>
    %191 = arith.addf %188, %190 : vector<8x512xf32>
    %192 = vector.broadcast %28 : f32 to vector<8x512xf32>
    %193 = arith.mulf %192, %133 : vector<8x512xf32>
    %194 = arith.addf %191, %193 : vector<8x512xf32>
    %195 = vector.broadcast %29 : f32 to vector<8x512xf32>
    %196 = arith.mulf %195, %139 : vector<8x512xf32>
    %197 = arith.addf %194, %196 : vector<8x512xf32>
    %198 = vector.broadcast %30 : f32 to vector<8x512xf32>
    %199 = arith.mulf %198, %145 : vector<8x512xf32>
    %200 = arith.addf %197, %199 : vector<8x512xf32>
    %201 = vector.broadcast %31 : f32 to vector<8x512xf32>
    %202 = arith.mulf %201, %151 : vector<8x512xf32>
    %203 = arith.addf %200, %202 : vector<8x512xf32>
    %204 = vector.broadcast %81 : f32 to vector<8x512xf32>
    %205 = arith.addf %203, %204 : vector<8x512xf32>
    %cst_44 = arith.constant 0.000000e+00 : f32
    %206 = vector.broadcast %cst_44 : f32 to vector<8x512xf32>
    %207 = arith.maximumf %205, %206 : vector<8x512xf32>
    %208 = vector.broadcast %89 : f32 to vector<8x512xf32>
    %209 = arith.mulf %208, %207 : vector<8x512xf32>
    %210 = arith.addf %180, %209 : vector<8x512xf32>
    %211 = vector.broadcast %32 : f32 to vector<8x512xf32>
    %212 = arith.mulf %211, %109 : vector<8x512xf32>
    %213 = vector.broadcast %33 : f32 to vector<8x512xf32>
    %214 = arith.mulf %213, %115 : vector<8x512xf32>
    %215 = arith.addf %212, %214 : vector<8x512xf32>
    %216 = vector.broadcast %34 : f32 to vector<8x512xf32>
    %217 = arith.mulf %216, %121 : vector<8x512xf32>
    %218 = arith.addf %215, %217 : vector<8x512xf32>
    %219 = vector.broadcast %35 : f32 to vector<8x512xf32>
    %220 = arith.mulf %219, %127 : vector<8x512xf32>
    %221 = arith.addf %218, %220 : vector<8x512xf32>
    %222 = vector.broadcast %36 : f32 to vector<8x512xf32>
    %223 = arith.mulf %222, %133 : vector<8x512xf32>
    %224 = arith.addf %221, %223 : vector<8x512xf32>
    %225 = vector.broadcast %37 : f32 to vector<8x512xf32>
    %226 = arith.mulf %225, %139 : vector<8x512xf32>
    %227 = arith.addf %224, %226 : vector<8x512xf32>
    %228 = vector.broadcast %38 : f32 to vector<8x512xf32>
    %229 = arith.mulf %228, %145 : vector<8x512xf32>
    %230 = arith.addf %227, %229 : vector<8x512xf32>
    %231 = vector.broadcast %39 : f32 to vector<8x512xf32>
    %232 = arith.mulf %231, %151 : vector<8x512xf32>
    %233 = arith.addf %230, %232 : vector<8x512xf32>
    %234 = vector.broadcast %82 : f32 to vector<8x512xf32>
    %235 = arith.addf %233, %234 : vector<8x512xf32>
    %cst_45 = arith.constant 0.000000e+00 : f32
    %236 = vector.broadcast %cst_45 : f32 to vector<8x512xf32>
    %237 = arith.maximumf %235, %236 : vector<8x512xf32>
    %238 = vector.broadcast %90 : f32 to vector<8x512xf32>
    %239 = arith.mulf %238, %237 : vector<8x512xf32>
    %240 = arith.addf %210, %239 : vector<8x512xf32>
    %241 = vector.broadcast %40 : f32 to vector<8x512xf32>
    %242 = arith.mulf %241, %109 : vector<8x512xf32>
    %243 = vector.broadcast %41 : f32 to vector<8x512xf32>
    %244 = arith.mulf %243, %115 : vector<8x512xf32>
    %245 = arith.addf %242, %244 : vector<8x512xf32>
    %246 = vector.broadcast %42 : f32 to vector<8x512xf32>
    %247 = arith.mulf %246, %121 : vector<8x512xf32>
    %248 = arith.addf %245, %247 : vector<8x512xf32>
    %249 = vector.broadcast %43 : f32 to vector<8x512xf32>
    %250 = arith.mulf %249, %127 : vector<8x512xf32>
    %251 = arith.addf %248, %250 : vector<8x512xf32>
    %252 = vector.broadcast %44 : f32 to vector<8x512xf32>
    %253 = arith.mulf %252, %133 : vector<8x512xf32>
    %254 = arith.addf %251, %253 : vector<8x512xf32>
    %255 = vector.broadcast %45 : f32 to vector<8x512xf32>
    %256 = arith.mulf %255, %139 : vector<8x512xf32>
    %257 = arith.addf %254, %256 : vector<8x512xf32>
    %258 = vector.broadcast %46 : f32 to vector<8x512xf32>
    %259 = arith.mulf %258, %145 : vector<8x512xf32>
    %260 = arith.addf %257, %259 : vector<8x512xf32>
    %261 = vector.broadcast %47 : f32 to vector<8x512xf32>
    %262 = arith.mulf %261, %151 : vector<8x512xf32>
    %263 = arith.addf %260, %262 : vector<8x512xf32>
    %264 = vector.broadcast %83 : f32 to vector<8x512xf32>
    %265 = arith.addf %263, %264 : vector<8x512xf32>
    %cst_46 = arith.constant 0.000000e+00 : f32
    %266 = vector.broadcast %cst_46 : f32 to vector<8x512xf32>
    %267 = arith.maximumf %265, %266 : vector<8x512xf32>
    %268 = vector.broadcast %91 : f32 to vector<8x512xf32>
    %269 = arith.mulf %268, %267 : vector<8x512xf32>
    %270 = arith.addf %240, %269 : vector<8x512xf32>
    %271 = vector.broadcast %48 : f32 to vector<8x512xf32>
    %272 = arith.mulf %271, %109 : vector<8x512xf32>
    %273 = vector.broadcast %49 : f32 to vector<8x512xf32>
    %274 = arith.mulf %273, %115 : vector<8x512xf32>
    %275 = arith.addf %272, %274 : vector<8x512xf32>
    %276 = vector.broadcast %50 : f32 to vector<8x512xf32>
    %277 = arith.mulf %276, %121 : vector<8x512xf32>
    %278 = arith.addf %275, %277 : vector<8x512xf32>
    %279 = vector.broadcast %51 : f32 to vector<8x512xf32>
    %280 = arith.mulf %279, %127 : vector<8x512xf32>
    %281 = arith.addf %278, %280 : vector<8x512xf32>
    %282 = vector.broadcast %52 : f32 to vector<8x512xf32>
    %283 = arith.mulf %282, %133 : vector<8x512xf32>
    %284 = arith.addf %281, %283 : vector<8x512xf32>
    %285 = vector.broadcast %53 : f32 to vector<8x512xf32>
    %286 = arith.mulf %285, %139 : vector<8x512xf32>
    %287 = arith.addf %284, %286 : vector<8x512xf32>
    %288 = vector.broadcast %54 : f32 to vector<8x512xf32>
    %289 = arith.mulf %288, %145 : vector<8x512xf32>
    %290 = arith.addf %287, %289 : vector<8x512xf32>
    %291 = vector.broadcast %55 : f32 to vector<8x512xf32>
    %292 = arith.mulf %291, %151 : vector<8x512xf32>
    %293 = arith.addf %290, %292 : vector<8x512xf32>
    %294 = vector.broadcast %84 : f32 to vector<8x512xf32>
    %295 = arith.addf %293, %294 : vector<8x512xf32>
    %cst_47 = arith.constant 0.000000e+00 : f32
    %296 = vector.broadcast %cst_47 : f32 to vector<8x512xf32>
    %297 = arith.maximumf %295, %296 : vector<8x512xf32>
    %298 = vector.broadcast %92 : f32 to vector<8x512xf32>
    %299 = arith.mulf %298, %297 : vector<8x512xf32>
    %300 = arith.addf %270, %299 : vector<8x512xf32>
    %301 = vector.broadcast %56 : f32 to vector<8x512xf32>
    %302 = arith.mulf %301, %109 : vector<8x512xf32>
    %303 = vector.broadcast %57 : f32 to vector<8x512xf32>
    %304 = arith.mulf %303, %115 : vector<8x512xf32>
    %305 = arith.addf %302, %304 : vector<8x512xf32>
    %306 = vector.broadcast %58 : f32 to vector<8x512xf32>
    %307 = arith.mulf %306, %121 : vector<8x512xf32>
    %308 = arith.addf %305, %307 : vector<8x512xf32>
    %309 = vector.broadcast %59 : f32 to vector<8x512xf32>
    %310 = arith.mulf %309, %127 : vector<8x512xf32>
    %311 = arith.addf %308, %310 : vector<8x512xf32>
    %312 = vector.broadcast %60 : f32 to vector<8x512xf32>
    %313 = arith.mulf %312, %133 : vector<8x512xf32>
    %314 = arith.addf %311, %313 : vector<8x512xf32>
    %315 = vector.broadcast %61 : f32 to vector<8x512xf32>
    %316 = arith.mulf %315, %139 : vector<8x512xf32>
    %317 = arith.addf %314, %316 : vector<8x512xf32>
    %318 = vector.broadcast %62 : f32 to vector<8x512xf32>
    %319 = arith.mulf %318, %145 : vector<8x512xf32>
    %320 = arith.addf %317, %319 : vector<8x512xf32>
    %321 = vector.broadcast %63 : f32 to vector<8x512xf32>
    %322 = arith.mulf %321, %151 : vector<8x512xf32>
    %323 = arith.addf %320, %322 : vector<8x512xf32>
    %324 = vector.broadcast %85 : f32 to vector<8x512xf32>
    %325 = arith.addf %323, %324 : vector<8x512xf32>
    %cst_48 = arith.constant 0.000000e+00 : f32
    %326 = vector.broadcast %cst_48 : f32 to vector<8x512xf32>
    %327 = arith.maximumf %325, %326 : vector<8x512xf32>
    %328 = vector.broadcast %93 : f32 to vector<8x512xf32>
    %329 = arith.mulf %328, %327 : vector<8x512xf32>
    %330 = arith.addf %300, %329 : vector<8x512xf32>
    %331 = vector.broadcast %64 : f32 to vector<8x512xf32>
    %332 = arith.mulf %331, %109 : vector<8x512xf32>
    %333 = vector.broadcast %65 : f32 to vector<8x512xf32>
    %334 = arith.mulf %333, %115 : vector<8x512xf32>
    %335 = arith.addf %332, %334 : vector<8x512xf32>
    %336 = vector.broadcast %66 : f32 to vector<8x512xf32>
    %337 = arith.mulf %336, %121 : vector<8x512xf32>
    %338 = arith.addf %335, %337 : vector<8x512xf32>
    %339 = vector.broadcast %67 : f32 to vector<8x512xf32>
    %340 = arith.mulf %339, %127 : vector<8x512xf32>
    %341 = arith.addf %338, %340 : vector<8x512xf32>
    %342 = vector.broadcast %68 : f32 to vector<8x512xf32>
    %343 = arith.mulf %342, %133 : vector<8x512xf32>
    %344 = arith.addf %341, %343 : vector<8x512xf32>
    %345 = vector.broadcast %69 : f32 to vector<8x512xf32>
    %346 = arith.mulf %345, %139 : vector<8x512xf32>
    %347 = arith.addf %344, %346 : vector<8x512xf32>
    %348 = vector.broadcast %70 : f32 to vector<8x512xf32>
    %349 = arith.mulf %348, %145 : vector<8x512xf32>
    %350 = arith.addf %347, %349 : vector<8x512xf32>
    %351 = vector.broadcast %71 : f32 to vector<8x512xf32>
    %352 = arith.mulf %351, %151 : vector<8x512xf32>
    %353 = arith.addf %350, %352 : vector<8x512xf32>
    %354 = vector.broadcast %86 : f32 to vector<8x512xf32>
    %355 = arith.addf %353, %354 : vector<8x512xf32>
    %cst_49 = arith.constant 0.000000e+00 : f32
    %356 = vector.broadcast %cst_49 : f32 to vector<8x512xf32>
    %357 = arith.maximumf %355, %356 : vector<8x512xf32>
    %358 = vector.broadcast %94 : f32 to vector<8x512xf32>
    %359 = arith.mulf %358, %357 : vector<8x512xf32>
    %360 = arith.addf %330, %359 : vector<8x512xf32>
    %361 = vector.broadcast %72 : f32 to vector<8x512xf32>
    %362 = arith.mulf %361, %109 : vector<8x512xf32>
    %363 = vector.broadcast %73 : f32 to vector<8x512xf32>
    %364 = arith.mulf %363, %115 : vector<8x512xf32>
    %365 = arith.addf %362, %364 : vector<8x512xf32>
    %366 = vector.broadcast %74 : f32 to vector<8x512xf32>
    %367 = arith.mulf %366, %121 : vector<8x512xf32>
    %368 = arith.addf %365, %367 : vector<8x512xf32>
    %369 = vector.broadcast %75 : f32 to vector<8x512xf32>
    %370 = arith.mulf %369, %127 : vector<8x512xf32>
    %371 = arith.addf %368, %370 : vector<8x512xf32>
    %372 = vector.broadcast %76 : f32 to vector<8x512xf32>
    %373 = arith.mulf %372, %133 : vector<8x512xf32>
    %374 = arith.addf %371, %373 : vector<8x512xf32>
    %375 = vector.broadcast %77 : f32 to vector<8x512xf32>
    %376 = arith.mulf %375, %139 : vector<8x512xf32>
    %377 = arith.addf %374, %376 : vector<8x512xf32>
    %378 = vector.broadcast %78 : f32 to vector<8x512xf32>
    %379 = arith.mulf %378, %145 : vector<8x512xf32>
    %380 = arith.addf %377, %379 : vector<8x512xf32>
    %381 = vector.broadcast %79 : f32 to vector<8x512xf32>
    %382 = arith.mulf %381, %151 : vector<8x512xf32>
    %383 = arith.addf %380, %382 : vector<8x512xf32>
    %384 = vector.broadcast %87 : f32 to vector<8x512xf32>
    %385 = arith.addf %383, %384 : vector<8x512xf32>
    %cst_50 = arith.constant 0.000000e+00 : f32
    %386 = vector.broadcast %cst_50 : f32 to vector<8x512xf32>
    %387 = arith.maximumf %385, %386 : vector<8x512xf32>
    %388 = vector.broadcast %95 : f32 to vector<8x512xf32>
    %389 = arith.mulf %388, %387 : vector<8x512xf32>
    %390 = arith.addf %360, %389 : vector<8x512xf32>
    %391 = vector.broadcast %96 : f32 to vector<8x512xf32>
    %392 = arith.addf %390, %391 : vector<8x512xf32>
    %393 = arith.index_cast %100 : i32 to index
    %c0_51 = arith.constant 0 : index
    %394 = vector.load %arg8[%393, %c0_51] : memref<8x512xf32, #tpu.memory_space<vmem>>, vector<8x512xf32>
    tpu.vector_store %arg8[%393, %c0_51], %392 {strides = array<i32>} : memref<8x512xf32, #tpu.memory_space<vmem>>, vector<8x512xf32>,
    %c1_i32_52 = arith.constant 1 : i32
    return
  }
  func.func @transform_0(%arg0: i32) -> i32 {
    %c0_i32 = arith.constant 0 : i32
    %c0_i32_0 = arith.constant 0 : i32
    return %c0_i32 : i32
  }
  func.func @transform_1(%arg0: i32) -> i32 {
    %c0_i32 = arith.constant 0 : i32
    %c0_i32_0 = arith.constant 0 : i32
    return %c0_i32 : i32
  }
  func.func @transform_2(%arg0: i32) -> i32 {
    %c0_i32 = arith.constant 0 : i32
    %c0_i32_0 = arith.constant 0 : i32
    return %c0_i32 : i32
  }
  func.func @transform_3(%arg0: i32) -> i32 {
    %c0_i32 = arith.constant 0 : i32
    %c0_i32_0 = arith.constant 0 : i32
    return %c0_i32 : i32
  }
  func.func @transform_4(%arg0: i32) -> i32 {
    %c0_i32 = arith.constant 0 : i32
    %c0_i32_0 = arith.constant 0 : i32
    return %c0_i32 : i32
  }
  func.func @transform_5(%arg0: i32) -> i32 {
    %c0_i32 = arith.constant 0 : i32
    %c0_i32_0 = arith.constant 0 : i32
    return %c0_i32 : i32
  }
  func.func @transform_6(%arg0: i32) -> (i32, i32, i32) {
    %c0_i32 = arith.constant 0 : i32
    %c0_i32_0 = arith.constant 0 : i32
    %c0_i32_1 = arith.constant 0 : i32
    return %c0_i32, %arg0, %c0_i32_0 : i32, i32, i32
  }
  func.func @transform_7(%arg0: i32) -> (i32, i32) {
    %c0_i32 = arith.constant 0 : i32
    %c0_i32_0 = arith.constant 0 : i32
    return %arg0, %c0_i32 : i32, i32
  }
}

</mosaic_0001>

<llo_original>
// kernel: tpu_custom_call.1
$region0: #{tpu_custom_call.1}
  #allocation0 [shape = 'u32[]', space=smem, size = 0x4, offset = 0x4, fixed_abs, tag = 'smem constant byte address 0x4 - core index']
  #allocation1 [shape = 'u32[72,128]{1,0:T(1,128)}', space=vmem, size = 0x9000, scoped, tag = 'internal scratch']
  #allocation2 [shape = 'f32[1]{0:T(128)S(6)}', space=smem, size = 0x200, scoped, tag = 'scoped memory for tpu_custom_call.1']
  %s0 = inlined_call_operand.vmem [shape: f32[8], index: 0, kind: input, shape index: {}]
  %s1 = inlined_call_operand.vmem [shape: f32[8], index: 1, kind: input, shape index: {}]
  %s2 = inlined_call_operand.vmem [shape: f32[64], index: 2, kind: input, shape index: {}]
  %s3 = inlined_call_operand.vmem [shape: f32[8], index: 3, kind: input, shape index: {}]
  %s4 = inlined_call_operand.vmem [shape: f32[8], index: 4, kind: input, shape index: {}]
  %s5 = inlined_call_operand.<no memory space> [shape: f32[1], index: 5, kind: input, shape index: {}]
  %s6 = inlined_call_operand.hbm [shape: f32[1,8,512], index: 6, kind: input, shape index: {}]
  %s7 = inlined_call_operand.hbm [shape: f32[8,512], index: 7, kind: output, shape index: {}]
  %s8 = sld [smem:[#allocation0]]
  $region62: #{tpu_custom_call.1} parent=0
    _
  %s10 = ssub.s32 1, %s8
  %s11 = scalar_select 0, %s10, %s8
  %12 = sst [smem:[#allocation2]] %s5
  $region1: #{tpu_custom_call.1} parent=0
    #allocation3 [shape = 'u8[512]{0}', space=smem, size = 0x200, scoped, tag = 'input window, operand 0, single buffered']
    #allocation4 [shape = 's32[1]{0}', space=sflag, size = 0x4, scoped, tag = 'scoped memory for tpu_custom_call.1']
    #allocation5 [shape = 's32[1]{0}', space=sflag, size = 0x4, scoped, tag = 'scoped memory for tpu_custom_call.1']
    #allocation6 [shape = 's32[1]{0}', space=sflag, size = 0x4, scoped, tag = 'scoped memory for tpu_custom_call.1']
    #allocation7 [shape = 'u8[512]{0}', space=smem, size = 0x200, scoped, tag = 'input window, operand 1, single buffered']
    #allocation8 [shape = 's32[1]{0}', space=sflag, size = 0x4, scoped, tag = 'scoped memory for tpu_custom_call.1']
    #allocation9 [shape = 'u8[512]{0}', space=smem, size = 0x200, scoped, tag = 'input window, operand 2, single buffered']
    #allocation10 [shape = 'u8[512]{0}', space=smem, size = 0x200, scoped, tag = 'input window, operand 3, single buffered']
    #allocation11 [shape = 's32[1]{0}', space=sflag, size = 0x4, scoped, tag = 'scoped memory for tpu_custom_call.1']
    #allocation12 [shape = 'u8[512]{0}', space=smem, size = 0x200, scoped, tag = 'input window, operand 4, single buffered']
    #allocation13 [shape = 'u8[16384]{0}', space=vmem, size = 0x4000, scoped, tag = 'input window, operand 6, single buffered']
    #allocation14 [shape = 'u8[16384]{0}', space=vmem, size = 0x4000, scoped, tag = 'output window, operand 0, single buffered']
    %13 = vsyncpa [#allocation6], 0
    %14 = vsyncpa [#allocation8], 0
    %15 = vsyncpa [#allocation11], 0
    %16 = vsyncpa [#allocation4], 0
    %17 = vsyncpa [#allocation5], 0
    // Predicated region
    $region2: #{tpu_custom_call.1} parent=1 // pred_check
      _
    $region3: #{tpu_custom_call.1} parent=1 // pred_check_branch
      %19 = sbr.rel (0) target = $region5
    $region4: #{tpu_custom_call.1} parent=1 // pred_region
      %21 = vsyncadd [#allocation6], 0
      %s23 = sshll.u32 %s0, 4
      %s24 = int_to_ptr.vmem [resolvable:$true] %s23
      %26 = dma.vmem_to_smem %s24, 16, [#allocation3], [#allocation6]
    $region5: #{tpu_custom_call.1} parent=1 // pred_fallthru
      _
    // Predicated region
    $region6: #{tpu_custom_call.1} parent=1 // pred_check
      _
    $region7: #{tpu_custom_call.1} parent=1 // pred_check_branch
      %28 = sbr.rel (0) target = $region9
    $region8: #{tpu_custom_call.1} parent=1 // pred_region
      %30 = vsyncadd [#allocation8], 0
      %s32 = sshll.u32 %s1, 4
      %s33 = int_to_ptr.vmem [resolvable:$true] %s32
      %35 = dma.vmem_to_smem %s33, 16, [#allocation7], [#allocation8]
    $region9: #{tpu_custom_call.1} parent=1 // pred_fallthru
      _
    // Predicated region
    $region10: #{tpu_custom_call.1} parent=1 // pred_check
      _
    $region11: #{tpu_custom_call.1} parent=1 // pred_check_branch
      %37 = sbr.rel (0) target = $region13
    $region12: #{tpu_custom_call.1} parent=1 // pred_region
      %39 = vsyncadd [#allocation8], 0
      %s41 = sshll.u32 %s2, 4
      %s42 = int_to_ptr.vmem [resolvable:$true] %s41
      %44 = dma.vmem_to_smem %s42, 16, [#allocation9], [#allocation8]
    $region13: #{tpu_custom_call.1} parent=1 // pred_fallthru
      _
    // Predicated region
    $region14: #{tpu_custom_call.1} parent=1 // pred_check
      _
    $region15: #{tpu_custom_call.1} parent=1 // pred_check_branch
      %46 = sbr.rel (0) target = $region17
    $region16: #{tpu_custom_call.1} parent=1 // pred_region
      %48 = vsyncadd [#allocation11], 0
      %s50 = sshll.u32 %s3, 4
      %s51 = int_to_ptr.vmem [resolvable:$true] %s50
      %53 = dma.vmem_to_smem %s51, 16, [#allocation10], [#allocation11]
    $region17: #{tpu_custom_call.1} parent=1 // pred_fallthru
      _
    // Predicated region
    $region18: #{tpu_custom_call.1} parent=1 // pred_check
      _
    $region19: #{tpu_custom_call.1} parent=1 // pred_check_branch
      %55 = sbr.rel (0) target = $region21
    $region20: #{tpu_custom_call.1} parent=1 // pred_region
      %57 = vsyncadd [#allocation11], 0
      %s59 = sshll.u32 %s4, 4
      %s60 = int_to_ptr.vmem [resolvable:$true] %s59
      %62 = dma.vmem_to_smem %s60, 16, [#allocation12], [#allocation11]
    $region21: #{tpu_custom_call.1} parent=1 // pred_fallthru
      _
    // Predicated region
    $region22: #{tpu_custom_call.1} parent=1 // pred_check
      _
    $region23: #{tpu_custom_call.1} parent=1 // pred_check_branch
      %64 = sbr.rel (0) target = $region25
    $region24: #{tpu_custom_call.1} parent=1 // pred_region
      _
    $region25: #{tpu_custom_call.1} parent=1 // pred_fallthru
      _
    // Predicated region
    $region26: #{tpu_custom_call.1} parent=1 // pred_check
      _
    $region27: #{tpu_custom_call.1} parent=1 // pred_check_branch
      %66 = sbr.rel (0) target = $region29
    $region28: #{tpu_custom_call.1} parent=1 // pred_region
      %68 = vsyncadd [#allocation4], 0
      %s70 = sshll.u32 %s6, 4
      %s71 = int_to_ptr.hbm [resolvable:$true] %s70
      %s72 = sshll.u32 [#allocation13], 4
      %s73 = int_to_ptr.vmem [resolvable:$true] %s72
      %75 = dma.hbm_to_vmem [thread:$0]  %s71, 512, %s73, [#allocation4]
    $region29: #{tpu_custom_call.1} parent=1 // pred_fallthru
      _
    // Predicated region
    $region30: #{tpu_custom_call.1} parent=1 // pred_check
      _
    $region31: #{tpu_custom_call.1} parent=1 // pred_check_branch
      %77 = sbr.rel (0) target = $region33
    $region32: #{tpu_custom_call.1} parent=1 // pred_region
      %79 = dma.done [#allocation6], 16
    $region33: #{tpu_custom_call.1} parent=1 // pred_fallthru
      _
    // Predicated region
    $region34: #{tpu_custom_call.1} parent=1 // pred_check
      _
    $region35: #{tpu_custom_call.1} parent=1 // pred_check_branch
      %81 = sbr.rel (0) target = $region37
    $region36: #{tpu_custom_call.1} parent=1 // pred_region
      %83 = dma.done [#allocation8], 16
    $region37: #{tpu_custom_call.1} parent=1 // pred_fallthru
      _
    // Predicated region
    $region38: #{tpu_custom_call.1} parent=1 // pred_check
      _
    $region39: #{tpu_custom_call.1} parent=1 // pred_check_branch
      %85 = sbr.rel (0) target = $region41
    $region40: #{tpu_custom_call.1} parent=1 // pred_region
      %87 = dma.done [#allocation8], 16
    $region41: #{tpu_custom_call.1} parent=1 // pred_fallthru
      _
    // Predicated region
    $region42: #{tpu_custom_call.1} parent=1 // pred_check
      _
    $region43: #{tpu_custom_call.1} parent=1 // pred_check_branch
      %89 = sbr.rel (0) target = $region45
    $region44: #{tpu_custom_call.1} parent=1 // pred_region
      %91 = dma.done [#allocation11], 16
    $region45: #{tpu_custom_call.1} parent=1 // pred_fallthru
      _
    // Predicated region
    $region46: #{tpu_custom_call.1} parent=1 // pred_check
      _
    $region47: #{tpu_custom_call.1} parent=1 // pred_check_branch
      %93 = sbr.rel (0) target = $region49
    $region48: #{tpu_custom_call.1} parent=1 // pred_region
      %95 = dma.done [#allocation11], 16
    $region49: #{tpu_custom_call.1} parent=1 // pred_fallthru
      _
    // Predicated region
    $region50: #{tpu_custom_call.1} parent=1 // pred_check
      _
    $region51: #{tpu_custom_call.1} parent=1 // pred_check_branch
      %97 = sbr.rel (0) target = $region53
    $region52: #{tpu_custom_call.1} parent=1 // pred_region
      %99 = dma.done [#allocation4], 512
    $region53: #{tpu_custom_call.1} parent=1 // pred_fallthru
      _
    %100 = sfence
    %s101 = sld [smem:[#allocation3]]
    %s102 = sld [smem:[#allocation3 + $0x1]]
    %s103 = sld [smem:[#allocation3 + $0x2]]
    %s104 = sld [smem:[#allocation3 + $0x3]]
    %s105 = sld [smem:[#allocation3 + $0x4]]
    %s106 = sld [smem:[#allocation3 + $0x5]]
    %s107 = sld [smem:[#allocation3 + $0x6]]
    %s108 = sld [smem:[#allocation3 + $0x7]]
    %s109 = sld [smem:[#allocation7]]
    %s110 = sld [smem:[#allocation7 + $0x1]]
    %s111 = sld [smem:[#allocation7 + $0x2]]
    %s112 = sld [smem:[#allocation7 + $0x3]]
    %s113 = sld [smem:[#allocation7 + $0x4]]
    %s114 = sld [smem:[#allocation7 + $0x5]]
    %s115 = sld [smem:[#allocation7 + $0x6]]
    %s116 = sld [smem:[#allocation7 + $0x7]]
    %s117 = sld [smem:[#allocation9]]
    %s118 = sld [smem:[#allocation9 + $0x1]]
    %s119 = sld [smem:[#allocation9 + $0x2]]
    %s120 = sld [smem:[#allocation9 + $0x3]]
    %s121 = sld [smem:[#allocation9 + $0x4]]
    %s122 = sld [smem:[#allocation9 + $0x5]]
    %s123 = sld [smem:[#allocation9 + $0x6]]
    %s124 = sld [smem:[#allocation9 + $0x7]]
    %s125 = sld [smem:[#allocation9 + $0x8]]
    %s126 = sld [smem:[#allocation9 + $0x9]]
    %s127 = sld [smem:[#allocation9 + $0xa]]
    %s128 = sld [smem:[#allocation9 + $0xb]]
    %s129 = sld [smem:[#allocation9 + $0xc]]
    %s130 = sld [smem:[#allocation9 + $0xd]]
    %s131 = sld [smem:[#allocation9 + $0xe]]
    %s132 = sld [smem:[#allocation9 + $0xf]]
    %s133 = sld [smem:[#allocation9 + $0x10]]
    %s134 = sld [smem:[#allocation9 + $0x11]]
    %s135 = sld [smem:[#allocation9 + $0x12]]
    %s136 = sld [smem:[#allocation9 + $0x13]]
    %s137 = sld [smem:[#allocation9 + $0x14]]
    %s138 = sld [smem:[#allocation9 + $0x15]]
    %s139 = sld [smem:[#allocation9 + $0x16]]
    %s140 = sld [smem:[#allocation9 + $0x17]]
    %s141 = sld [smem:[#allocation9 + $0x18]]
    %s142 = sld [smem:[#allocation9 + $0x19]]
    %s143 = sld [smem:[#allocation9 + $0x1a]]
    %s144 = sld [smem:[#allocation9 + $0x1b]]
    %s145 = sld [smem:[#allocation9 + $0x1c]]
    %s146 = sld [smem:[#allocation9 + $0x1d]]
    %s147 = sld [smem:[#allocation9 + $0x1e]]
    %s148 = sld [smem:[#allocation9 + $0x1f]]
    %s149 = sld [smem:[#allocation9 + $0x20]]
    %s150 = sld [smem:[#allocation9 + $0x21]]
    %s151 = sld [smem:[#allocation9 + $0x22]]
    %s152 = sld [smem:[#allocation9 + $0x23]]
    %s153 = sld [smem:[#allocation9 + $0x24]]
    %s154 = sld [smem:[#allocation9 + $0x25]]
    %s155 = sld [smem:[#allocation9 + $0x26]]
    %s156 = sld [smem:[#allocation9 + $0x27]]
    %s157 = sld [smem:[#allocation9 + $0x28]]
    %s158 = sld [smem:[#allocation9 + $0x29]]
    %s159 = sld [smem:[#allocation9 + $0x2a]]
    %s160 = sld [smem:[#allocation9 + $0x2b]]
    %s161 = sld [smem:[#allocation9 + $0x2c]]
    %s162 = sld [smem:[#allocation9 + $0x2d]]
    %s163 = sld [smem:[#allocation9 + $0x2e]]
    %s164 = sld [smem:[#allocation9 + $0x2f]]
    %s165 = sld [smem:[#allocation9 + $0x30]]
    %s166 = sld [smem:[#allocation9 + $0x31]]
    %s167 = sld [smem:[#allocation9 + $0x32]]
    %s168 = sld [smem:[#allocation9 + $0x33]]
    %s169 = sld [smem:[#allocation9 + $0x34]]
    %s170 = sld [smem:[#allocation9 + $0x35]]
    %s171 = sld [smem:[#allocation9 + $0x36]]
    %s172 = sld [smem:[#allocation9 + $0x37]]
    %s173 = sld [smem:[#allocation9 + $0x38]]
    %s174 = sld [smem:[#allocation9 + $0x39]]
    %s175 = sld [smem:[#allocation9 + $0x3a]]
    %s176 = sld [smem:[#allocation9 + $0x3b]]
    %s177 = sld [smem:[#allocation9 + $0x3c]]
    %s178 = sld [smem:[#allocation9 + $0x3d]]
    %s179 = sld [smem:[#allocation9 + $0x3e]]
    %s180 = sld [smem:[#allocation9 + $0x3f]]
    %s181 = sld [smem:[#allocation10]]
    %s182 = sld [smem:[#allocation10 + $0x1]]
    %s183 = sld [smem:[#allocation10 + $0x2]]
    %s184 = sld [smem:[#allocation10 + $0x3]]
    %s185 = sld [smem:[#allocation10 + $0x4]]
    %s186 = sld [smem:[#allocation10 + $0x5]]
    %s187 = sld [smem:[#allocation10 + $0x6]]
    %s188 = sld [smem:[#allocation10 + $0x7]]
    %s189 = sld [smem:[#allocation12]]
    %s190 = sld [smem:[#allocation12 + $0x1]]
    %s191 = sld [smem:[#allocation12 + $0x2]]
    %s192 = sld [smem:[#allocation12 + $0x3]]
    %s193 = sld [smem:[#allocation12 + $0x4]]
    %s194 = sld [smem:[#allocation12 + $0x5]]
    %s195 = sld [smem:[#allocation12 + $0x6]]
    %s196 = sld [smem:[#allocation12 + $0x7]]
    %s197 = sld [smem:[#allocation2]]
    %s198 = smul.u32 0, 4
    %s199 = smul.addr %s198, 8
    %s200 = scalar_lea.vmem [#allocation13], %s199
    %v201 = vld [vmem:[%s200] sm:$0xff]
    %v202 = vld [vmem:[%s200 + $0x8] sm:$0xff]
    %v203 = vld [vmem:[%s200 + $0x10] sm:$0xff]
    %v204 = vld [vmem:[%s200 + $0x18] sm:$0xff]
    %v205 = vstv %s101
    %v206 = vmul.f32 %v205, %v201
    %v207 = vmul.f32 %v205, %v202
    %v208 = vmul.f32 %v205, %v203
    %v209 = vmul.f32 %v205, %v204
    %v210 = vstv %s109
    %v211 = vadd.f32 %v206, %v210
    %v212 = vadd.f32 %v207, %v210
    %v213 = vadd.f32 %v208, %v210
    %v214 = vadd.f32 %v209, %v210
    %v215 = vmax.f32 %v211, 0.0
    %v216 = vmax.f32 %v212, 0.0
    %v217 = vmax.f32 %v213, 0.0
    %v218 = vmax.f32 %v214, 0.0
    %v219 = vstv %s102
    %v220 = vmul.f32 %v219, %v201
    %v221 = vmul.f32 %v219, %v202
    %v222 = vmul.f32 %v219, %v203
    %v223 = vmul.f32 %v219, %v204
    %v224 = vstv %s110
    %v225 = vadd.f32 %v220, %v224
    %v226 = vadd.f32 %v221, %v224
    %v227 = vadd.f32 %v222, %v224
    %v228 = vadd.f32 %v223, %v224
    %v229 = vmax.f32 %v225, 0.0
    %v230 = vmax.f32 %v226, 0.0
    %v231 = vmax.f32 %v227, 0.0
    %v232 = vmax.f32 %v228, 0.0
    %v233 = vstv %s103
    %v234 = vmul.f32 %v233, %v201
    %v235 = vmul.f32 %v233, %v202
    %v236 = vmul.f32 %v233, %v203
    %v237 = vmul.f32 %v233, %v204
    %v238 = vstv %s111
    %v239 = vadd.f32 %v234, %v238
    %v240 = vadd.f32 %v235, %v238
    %v241 = vadd.f32 %v236, %v238
    %v242 = vadd.f32 %v237, %v238
    %v243 = vmax.f32 %v239, 0.0
    %v244 = vmax.f32 %v240, 0.0
    %v245 = vmax.f32 %v241, 0.0
    %v246 = vmax.f32 %v242, 0.0
    %v247 = vstv %s104
    %v248 = vmul.f32 %v247, %v201
    %v249 = vmul.f32 %v247, %v202
    %v250 = vmul.f32 %v247, %v203
    %v251 = vmul.f32 %v247, %v204
    %v252 = vstv %s112
    %v253 = vadd.f32 %v248, %v252
    %v254 = vadd.f32 %v249, %v252
    %v255 = vadd.f32 %v250, %v252
    %v256 = vadd.f32 %v251, %v252
    %v257 = vmax.f32 %v253, 0.0
    %v258 = vmax.f32 %v254, 0.0
    %v259 = vmax.f32 %v255, 0.0
    %v260 = vmax.f32 %v256, 0.0
    %v261 = vstv %s105
    %v262 = vmul.f32 %v261, %v201
    %v263 = vmul.f32 %v261, %v202
    %v264 = vmul.f32 %v261, %v203
    %v265 = vmul.f32 %v261, %v204
    %v266 = vstv %s113
    %v267 = vadd.f32 %v262, %v266
    %v268 = vadd.f32 %v263, %v266
    %v269 = vadd.f32 %v264, %v266
    %v270 = vadd.f32 %v265, %v266
    %v271 = vmax.f32 %v267, 0.0
    %v272 = vmax.f32 %v268, 0.0
    %v273 = vmax.f32 %v269, 0.0
    %v274 = vmax.f32 %v270, 0.0
    %v275 = vstv %s106
    %v276 = vmul.f32 %v275, %v201
    %v277 = vmul.f32 %v275, %v202
    %v278 = vmul.f32 %v275, %v203
    %v279 = vmul.f32 %v275, %v204
    %v280 = vstv %s114
    %v281 = vadd.f32 %v276, %v280
    %v282 = vadd.f32 %v277, %v280
    %v283 = vadd.f32 %v278, %v280
    %v284 = vadd.f32 %v279, %v280
    %v285 = vmax.f32 %v281, 0.0
    %v286 = vmax.f32 %v282, 0.0
    %v287 = vmax.f32 %v283, 0.0
    %v288 = vmax.f32 %v284, 0.0
    %v289 = vstv %s107
    %v290 = vmul.f32 %v289, %v201
    %v291 = vmul.f32 %v289, %v202
    %v292 = vmul.f32 %v289, %v203
    %v293 = vmul.f32 %v289, %v204
    %v294 = vstv %s115
    %v295 = vadd.f32 %v290, %v294
    %v296 = vadd.f32 %v291, %v294
    %v297 = vadd.f32 %v292, %v294
    %v298 = vadd.f32 %v293, %v294
    %v299 = vmax.f32 %v295, 0.0
    %v300 = vmax.f32 %v296, 0.0
    %v301 = vmax.f32 %v297, 0.0
    %v302 = vmax.f32 %v298, 0.0
    %v303 = vstv %s108
    %v304 = vmul.f32 %v303, %v201
    %v305 = vmul.f32 %v303, %v202
    %v306 = vmul.f32 %v303, %v203
    %v307 = vmul.f32 %v303, %v204
    %v308 = vstv %s116
    %v309 = vadd.f32 %v304, %v308
    %v310 = vadd.f32 %v305, %v308
    %v311 = vadd.f32 %v306, %v308
    %v312 = vadd.f32 %v307, %v308
    %v313 = vmax.f32 %v309, 0.0
    %v314 = vmax.f32 %v310, 0.0
    %v315 = vmax.f32 %v311, 0.0
    %v316 = vmax.f32 %v312, 0.0
    %v317 = vstv %s117
    %v318 = vmul.f32 %v317, %v215
    %v319 = vmul.f32 %v317, %v216
    %v320 = vmul.f32 %v317, %v217
    %v321 = vmul.f32 %v317, %v218
    %v322 = vstv %s118
    %v323 = vmul.f32 %v322, %v229
    %v324 = vmul.f32 %v322, %v230
    %v325 = vmul.f32 %v322, %v231
    %v326 = vmul.f32 %v322, %v232
    %v327 = vadd.f32 %v318, %v323
    %v328 = vadd.f32 %v319, %v324
    %v329 = vadd.f32 %v320, %v325
    %v330 = vadd.f32 %v321, %v326
    %v331 = vstv %s119
    %v332 = vmul.f32 %v331, %v243
    %v333 = vmul.f32 %v331, %v244
    %v334 = vmul.f32 %v331, %v245
    %v335 = vmul.f32 %v331, %v246
    %v336 = vadd.f32 %v327, %v332
    %v337 = vadd.f32 %v328, %v333
    %v338 = vadd.f32 %v329, %v334
    %v339 = vadd.f32 %v330, %v335
    %v340 = vstv %s120
    %v341 = vmul.f32 %v340, %v257
    %v342 = vmul.f32 %v340, %v258
    %v343 = vmul.f32 %v340, %v259
    %v344 = vmul.f32 %v340, %v260
    %v345 = vadd.f32 %v336, %v341
    %v346 = vadd.f32 %v337, %v342
    %v347 = vadd.f32 %v338, %v343
    %v348 = vadd.f32 %v339, %v344
    %v349 = vstv %s121
    %v350 = vmul.f32 %v349, %v271
    %v351 = vmul.f32 %v349, %v272
    %v352 = vmul.f32 %v349, %v273
    %v353 = vmul.f32 %v349, %v274
    %v354 = vadd.f32 %v345, %v350
    %v355 = vadd.f32 %v346, %v351
    %v356 = vadd.f32 %v347, %v352
    %v357 = vadd.f32 %v348, %v353
    %v358 = vstv %s122
    %v359 = vmul.f32 %v358, %v285
    %v360 = vmul.f32 %v358, %v286
    %v361 = vmul.f32 %v358, %v287
    %v362 = vmul.f32 %v358, %v288
    %v363 = vadd.f32 %v354, %v359
    %v364 = vadd.f32 %v355, %v360
    %v365 = vadd.f32 %v356, %v361
    %v366 = vadd.f32 %v357, %v362
    %v367 = vstv %s123
    %v368 = vmul.f32 %v367, %v299
    %v369 = vmul.f32 %v367, %v300
    %v370 = vmul.f32 %v367, %v301
    %v371 = vmul.f32 %v367, %v302
    %v372 = vadd.f32 %v363, %v368
    %v373 = vadd.f32 %v364, %v369
    %v374 = vadd.f32 %v365, %v370
    %v375 = vadd.f32 %v366, %v371
    %v376 = vstv %s124
    %v377 = vmul.f32 %v376, %v313
    %v378 = vmul.f32 %v376, %v314
    %v379 = vmul.f32 %v376, %v315
    %v380 = vmul.f32 %v376, %v316
    %v381 = vadd.f32 %v372, %v377
    %v382 = vadd.f32 %v373, %v378
    %v383 = vadd.f32 %v374, %v379
    %v384 = vadd.f32 %v375, %v380
    %v385 = vstv %s181
    %v386 = vadd.f32 %v381, %v385
    %v387 = vadd.f32 %v382, %v385
    %v388 = vadd.f32 %v383, %v385
    %v389 = vadd.f32 %v384, %v385
    %v390 = vmax.f32 %v386, 0.0
    %v391 = vmax.f32 %v387, 0.0
    %v392 = vmax.f32 %v388, 0.0
    %v393 = vmax.f32 %v389, 0.0
    %v394 = vstv %s189
    %v395 = vmul.f32 %v394, %v390
    %v396 = vmul.f32 %v394, %v391
    %v397 = vmul.f32 %v394, %v392
    %v398 = vmul.f32 %v394, %v393
    %v399 = vstv %s125
    %v400 = vmul.f32 %v399, %v215
    %v401 = vmul.f32 %v399, %v216
    %v402 = vmul.f32 %v399, %v217
    %v403 = vmul.f32 %v399, %v218
    %v404 = vstv %s126
    %v405 = vmul.f32 %v404, %v229
    %v406 = vmul.f32 %v404, %v230
    %v407 = vmul.f32 %v404, %v231
    %v408 = vmul.f32 %v404, %v232
    %v409 = vadd.f32 %v400, %v405
    %v410 = vadd.f32 %v401, %v406
    %v411 = vadd.f32 %v402, %v407
    %v412 = vadd.f32 %v403, %v408
    %v413 = vstv %s127
    %v414 = vmul.f32 %v413, %v243
    %v415 = vmul.f32 %v413, %v244
    %v416 = vmul.f32 %v413, %v245
    %v417 = vmul.f32 %v413, %v246
    %v418 = vadd.f32 %v409, %v414
    %v419 = vadd.f32 %v410, %v415
    %v420 = vadd.f32 %v411, %v416
    %v421 = vadd.f32 %v412, %v417
    %v422 = vstv %s128
    %v423 = vmul.f32 %v422, %v257
    %v424 = vmul.f32 %v422, %v258
    %v425 = vmul.f32 %v422, %v259
    %v426 = vmul.f32 %v422, %v260
    %v427 = vadd.f32 %v418, %v423
    %v428 = vadd.f32 %v419, %v424
    %v429 = vadd.f32 %v420, %v425
    %v430 = vadd.f32 %v421, %v426
    %v431 = vstv %s129
    %v432 = vmul.f32 %v431, %v271
    %v433 = vmul.f32 %v431, %v272
    %v434 = vmul.f32 %v431, %v273
    %v435 = vmul.f32 %v431, %v274
    %v436 = vadd.f32 %v427, %v432
    %v437 = vadd.f32 %v428, %v433
    %v438 = vadd.f32 %v429, %v434
    %v439 = vadd.f32 %v430, %v435
    %v440 = vstv %s130
    %v441 = vmul.f32 %v440, %v285
    %v442 = vmul.f32 %v440, %v286
    %v443 = vmul.f32 %v440, %v287
    %v444 = vmul.f32 %v440, %v288
    %v445 = vadd.f32 %v436, %v441
    %v446 = vadd.f32 %v437, %v442
    %v447 = vadd.f32 %v438, %v443
    %v448 = vadd.f32 %v439, %v444
    %v449 = vstv %s131
    %v450 = vmul.f32 %v449, %v299
    %v451 = vmul.f32 %v449, %v300
    %v452 = vmul.f32 %v449, %v301
    %v453 = vmul.f32 %v449, %v302
    %v454 = vadd.f32 %v445, %v450
    %v455 = vadd.f32 %v446, %v451
    %v456 = vadd.f32 %v447, %v452
    %v457 = vadd.f32 %v448, %v453
    %v458 = vstv %s132
    %v459 = vmul.f32 %v458, %v313
    %v460 = vmul.f32 %v458, %v314
    %v461 = vmul.f32 %v458, %v315
    %v462 = vmul.f32 %v458, %v316
    %v463 = vadd.f32 %v454, %v459
    %v464 = vadd.f32 %v455, %v460
    %v465 = vadd.f32 %v456, %v461
    %v466 = vadd.f32 %v457, %v462
    %v467 = vstv %s182
    %v468 = vadd.f32 %v463, %v467
    %v469 = vadd.f32 %v464, %v467
    %v470 = vadd.f32 %v465, %v467
    %v471 = vadd.f32 %v466, %v467
    %v472 = vmax.f32 %v468, 0.0
    %v473 = vmax.f32 %v469, 0.0
    %v474 = vmax.f32 %v470, 0.0
    %v475 = vmax.f32 %v471, 0.0
    %v476 = vstv %s190
    %v477 = vmul.f32 %v476, %v472
    %v478 = vmul.f32 %v476, %v473
    %v479 = vmul.f32 %v476, %v474
    %v480 = vmul.f32 %v476, %v475
    %v481 = vadd.f32 %v395, %v477
    %v482 = vadd.f32 %v396, %v478
    %v483 = vadd.f32 %v397, %v479
    %v484 = vadd.f32 %v398, %v480
    %v485 = vstv %s133
    %v486 = vmul.f32 %v485, %v215
    %v487 = vmul.f32 %v485, %v216
    %v488 = vmul.f32 %v485, %v217
    %v489 = vmul.f32 %v485, %v218
    %v490 = vstv %s134
    %v491 = vmul.f32 %v490, %v229
    %v492 = vmul.f32 %v490, %v230
    %v493 = vmul.f32 %v490, %v231
    %v494 = vmul.f32 %v490, %v232
    %v495 = vadd.f32 %v486, %v491
    %v496 = vadd.f32 %v487, %v492
    %v497 = vadd.f32 %v488, %v493
    %v498 = vadd.f32 %v489, %v494
    %v499 = vstv %s135
    %v500 = vmul.f32 %v499, %v243
    %v501 = vmul.f32 %v499, %v244
    %v502 = vmul.f32 %v499, %v245
    %v503 = vmul.f32 %v499, %v246
    %v504 = vadd.f32 %v495, %v500
    %v505 = vadd.f32 %v496, %v501
    %v506 = vadd.f32 %v497, %v502
    %v507 = vadd.f32 %v498, %v503
    %v508 = vstv %s136
    %v509 = vmul.f32 %v508, %v257
    %v510 = vmul.f32 %v508, %v258
    %v511 = vmul.f32 %v508, %v259
    %v512 = vmul.f32 %v508, %v260
    %v513 = vadd.f32 %v504, %v509
    %v514 = vadd.f32 %v505, %v510
    %v515 = vadd.f32 %v506, %v511
    %v516 = vadd.f32 %v507, %v512
    %v517 = vstv %s137
    %v518 = vmul.f32 %v517, %v271
    %v519 = vmul.f32 %v517, %v272
    %v520 = vmul.f32 %v517, %v273
    %v521 = vmul.f32 %v517, %v274
    %v522 = vadd.f32 %v513, %v518
    %v523 = vadd.f32 %v514, %v519
    %v524 = vadd.f32 %v515, %v520
    %v525 = vadd.f32 %v516, %v521
    %v526 = vstv %s138
    %v527 = vmul.f32 %v526, %v285
    %v528 = vmul.f32 %v526, %v286
    %v529 = vmul.f32 %v526, %v287
    %v530 = vmul.f32 %v526, %v288
    %v531 = vadd.f32 %v522, %v527
    %v532 = vadd.f32 %v523, %v528
    %v533 = vadd.f32 %v524, %v529
    %v534 = vadd.f32 %v525, %v530
    %v535 = vstv %s139
    %v536 = vmul.f32 %v535, %v299
    %v537 = vmul.f32 %v535, %v300
    %v538 = vmul.f32 %v535, %v301
    %v539 = vmul.f32 %v535, %v302
    %v540 = vadd.f32 %v531, %v536
    %v541 = vadd.f32 %v532, %v537
    %v542 = vadd.f32 %v533, %v538
    %v543 = vadd.f32 %v534, %v539
    %v544 = vstv %s140
    %v545 = vmul.f32 %v544, %v313
    %v546 = vmul.f32 %v544, %v314
    %v547 = vmul.f32 %v544, %v315
    %v548 = vmul.f32 %v544, %v316
    %v549 = vadd.f32 %v540, %v545
    %v550 = vadd.f32 %v541, %v546
    %v551 = vadd.f32 %v542, %v547
    %v552 = vadd.f32 %v543, %v548
    %v553 = vstv %s183
    %v554 = vadd.f32 %v549, %v553
    %v555 = vadd.f32 %v550, %v553
    %v556 = vadd.f32 %v551, %v553
    %v557 = vadd.f32 %v552, %v553
    %v558 = vmax.f32 %v554, 0.0
    %v559 = vmax.f32 %v555, 0.0
    %v560 = vmax.f32 %v556, 0.0
    %v561 = vmax.f32 %v557, 0.0
    %v562 = vstv %s191
    %v563 = vmul.f32 %v562, %v558
    %v564 = vmul.f32 %v562, %v559
    %v565 = vmul.f32 %v562, %v560
    %v566 = vmul.f32 %v562, %v561
    %v567 = vadd.f32 %v481, %v563
    %v568 = vadd.f32 %v482, %v564
    %v569 = vadd.f32 %v483, %v565
    %v570 = vadd.f32 %v484, %v566
    %v571 = vstv %s141
    %v572 = vmul.f32 %v571, %v215
    %v573 = vmul.f32 %v571, %v216
    %v574 = vmul.f32 %v571, %v217
    %v575 = vmul.f32 %v571, %v218
    %v576 = vstv %s142
    %v577 = vmul.f32 %v576, %v229
    %v578 = vmul.f32 %v576, %v230
    %v579 = vmul.f32 %v576, %v231
    %v580 = vmul.f32 %v576, %v232
    %v581 = vadd.f32 %v572, %v577
    %v582 = vadd.f32 %v573, %v578
    %v583 = vadd.f32 %v574, %v579
    %v584 = vadd.f32 %v575, %v580
    %v585 = vstv %s143
    %v586 = vmul.f32 %v585, %v243
    %v587 = vmul.f32 %v585, %v244
    %v588 = vmul.f32 %v585, %v245
    %v589 = vmul.f32 %v585, %v246
    %v590 = vadd.f32 %v581, %v586
    %v591 = vadd.f32 %v582, %v587
    %v592 = vadd.f32 %v583, %v588
    %v593 = vadd.f32 %v584, %v589
    %v594 = vstv %s144
    %v595 = vmul.f32 %v594, %v257
    %v596 = vmul.f32 %v594, %v258
    %v597 = vmul.f32 %v594, %v259
    %v598 = vmul.f32 %v594, %v260
    %v599 = vadd.f32 %v590, %v595
    %v600 = vadd.f32 %v591, %v596
    %v601 = vadd.f32 %v592, %v597
    %v602 = vadd.f32 %v593, %v598
    %v603 = vstv %s145
    %v604 = vmul.f32 %v603, %v271
    %v605 = vmul.f32 %v603, %v272
    %v606 = vmul.f32 %v603, %v273
    %v607 = vmul.f32 %v603, %v274
    %v608 = vadd.f32 %v599, %v604
    %v609 = vadd.f32 %v600, %v605
    %v610 = vadd.f32 %v601, %v606
    %v611 = vadd.f32 %v602, %v607
    %v612 = vstv %s146
    %v613 = vmul.f32 %v612, %v285
    %v614 = vmul.f32 %v612, %v286
    %v615 = vmul.f32 %v612, %v287
    %v616 = vmul.f32 %v612, %v288
    %v617 = vadd.f32 %v608, %v613
    %v618 = vadd.f32 %v609, %v614
    %v619 = vadd.f32 %v610, %v615
    %v620 = vadd.f32 %v611, %v616
    %v621 = vstv %s147
    %v622 = vmul.f32 %v621, %v299
    %v623 = vmul.f32 %v621, %v300
    %v624 = vmul.f32 %v621, %v301
    %v625 = vmul.f32 %v621, %v302
    %v626 = vadd.f32 %v617, %v622
    %v627 = vadd.f32 %v618, %v623
    %v628 = vadd.f32 %v619, %v624
    %v629 = vadd.f32 %v620, %v625
    %v630 = vstv %s148
    %v631 = vmul.f32 %v630, %v313
    %v632 = vmul.f32 %v630, %v314
    %v633 = vmul.f32 %v630, %v315
    %v634 = vmul.f32 %v630, %v316
    %v635 = vadd.f32 %v626, %v631
    %v636 = vadd.f32 %v627, %v632
    %v637 = vadd.f32 %v628, %v633
    %v638 = vadd.f32 %v629, %v634
    %v639 = vstv %s184
    %v640 = vadd.f32 %v635, %v639
    %v641 = vadd.f32 %v636, %v639
    %v642 = vadd.f32 %v637, %v639
    %v643 = vadd.f32 %v638, %v639
    %v644 = vmax.f32 %v640, 0.0
    %v645 = vmax.f32 %v641, 0.0
    %v646 = vmax.f32 %v642, 0.0
    %v647 = vmax.f32 %v643, 0.0
    %v648 = vstv %s192
    %v649 = vmul.f32 %v648, %v644
    %v650 = vmul.f32 %v648, %v645
    %v651 = vmul.f32 %v648, %v646
    %v652 = vmul.f32 %v648, %v647
    %v653 = vadd.f32 %v567, %v649
    %v654 = vadd.f32 %v568, %v650
    %v655 = vadd.f32 %v569, %v651
    %v656 = vadd.f32 %v570, %v652
    %v657 = vstv %s149
    %v658 = vmul.f32 %v657, %v215
    %v659 = vmul.f32 %v657, %v216
    %v660 = vmul.f32 %v657, %v217
    %v661 = vmul.f32 %v657, %v218
    %v662 = vstv %s150
    %v663 = vmul.f32 %v662, %v229
    %v664 = vmul.f32 %v662, %v230
    %v665 = vmul.f32 %v662, %v231
    %v666 = vmul.f32 %v662, %v232
    %v667 = vadd.f32 %v658, %v663
    %v668 = vadd.f32 %v659, %v664
    %v669 = vadd.f32 %v660, %v665
    %v670 = vadd.f32 %v661, %v666
    %v671 = vstv %s151
    %v672 = vmul.f32 %v671, %v243
    %v673 = vmul.f32 %v671, %v244
    %v674 = vmul.f32 %v671, %v245
    %v675 = vmul.f32 %v671, %v246
    %v676 = vadd.f32 %v667, %v672
    %v677 = vadd.f32 %v668, %v673
    %v678 = vadd.f32 %v669, %v674
    %v679 = vadd.f32 %v670, %v675
    %v680 = vstv %s152
    %v681 = vmul.f32 %v680, %v257
    %v682 = vmul.f32 %v680, %v258
    %v683 = vmul.f32 %v680, %v259
    %v684 = vmul.f32 %v680, %v260
    %v685 = vadd.f32 %v676, %v681
    %v686 = vadd.f32 %v677, %v682
    %v687 = vadd.f32 %v678, %v683
    %v688 = vadd.f32 %v679, %v684
    %v689 = vstv %s153
    %v690 = vmul.f32 %v689, %v271
    %v691 = vmul.f32 %v689, %v272
    %v692 = vmul.f32 %v689, %v273
    %v693 = vmul.f32 %v689, %v274
    %v694 = vadd.f32 %v685, %v690
    %v695 = vadd.f32 %v686, %v691
    %v696 = vadd.f32 %v687, %v692
    %v697 = vadd.f32 %v688, %v693
    %v698 = vstv %s154
    %v699 = vmul.f32 %v698, %v285
    %v700 = vmul.f32 %v698, %v286
    %v701 = vmul.f32 %v698, %v287
    %v702 = vmul.f32 %v698, %v288
    %v703 = vadd.f32 %v694, %v699
    %v704 = vadd.f32 %v695, %v700
    %v705 = vadd.f32 %v696, %v701
    %v706 = vadd.f32 %v697, %v702
    %v707 = vstv %s155
    %v708 = vmul.f32 %v707, %v299
    %v709 = vmul.f32 %v707, %v300
    %v710 = vmul.f32 %v707, %v301
    %v711 = vmul.f32 %v707, %v302
    %v712 = vadd.f32 %v703, %v708
    %v713 = vadd.f32 %v704, %v709
    %v714 = vadd.f32 %v705, %v710
    %v715 = vadd.f32 %v706, %v711
    %v716 = vstv %s156
    %v717 = vmul.f32 %v716, %v313
    %v718 = vmul.f32 %v716, %v314
    %v719 = vmul.f32 %v716, %v315
    %v720 = vmul.f32 %v716, %v316
    %v721 = vadd.f32 %v712, %v717
    %v722 = vadd.f32 %v713, %v718
    %v723 = vadd.f32 %v714, %v719
    %v724 = vadd.f32 %v715, %v720
    %v725 = vstv %s185
    %v726 = vadd.f32 %v721, %v725
    %v727 = vadd.f32 %v722, %v725
    %v728 = vadd.f32 %v723, %v725
    %v729 = vadd.f32 %v724, %v725
    %v730 = vmax.f32 %v726, 0.0
    %v731 = vmax.f32 %v727, 0.0
    %v732 = vmax.f32 %v728, 0.0
    %v733 = vmax.f32 %v729, 0.0
    %v734 = vstv %s193
    %v735 = vmul.f32 %v734, %v730
    %v736 = vmul.f32 %v734, %v731
    %v737 = vmul.f32 %v734, %v732
    %v738 = vmul.f32 %v734, %v733
    %v739 = vadd.f32 %v653, %v735
    %v740 = vadd.f32 %v654, %v736
    %v741 = vadd.f32 %v655, %v737
    %v742 = vadd.f32 %v656, %v738
    %v743 = vstv %s157
    %v744 = vmul.f32 %v743, %v215
    %v745 = vmul.f32 %v743, %v216
    %v746 = vmul.f32 %v743, %v217
    %v747 = vmul.f32 %v743, %v218
    %v748 = vstv %s158
    %v749 = vmul.f32 %v748, %v229
    %v750 = vmul.f32 %v748, %v230
    %v751 = vmul.f32 %v748, %v231
    %v752 = vmul.f32 %v748, %v232
    %v753 = vadd.f32 %v744, %v749
    %v754 = vadd.f32 %v745, %v750
    %v755 = vadd.f32 %v746, %v751
    %v756 = vadd.f32 %v747, %v752
    %v757 = vstv %s159
    %v758 = vmul.f32 %v757, %v243
    %v759 = vmul.f32 %v757, %v244
    %v760 = vmul.f32 %v757, %v245
    %v761 = vmul.f32 %v757, %v246
    %v762 = vadd.f32 %v753, %v758
    %v763 = vadd.f32 %v754, %v759
    %v764 = vadd.f32 %v755, %v760
    %v765 = vadd.f32 %v756, %v761
    %v766 = vstv %s160
    %v767 = vmul.f32 %v766, %v257
    %v768 = vmul.f32 %v766, %v258
    %v769 = vmul.f32 %v766, %v259
    %v770 = vmul.f32 %v766, %v260
    %v771 = vadd.f32 %v762, %v767
    %v772 = vadd.f32 %v763, %v768
    %v773 = vadd.f32 %v764, %v769
    %v774 = vadd.f32 %v765, %v770
    %v775 = vstv %s161
    %v776 = vmul.f32 %v775, %v271
    %v777 = vmul.f32 %v775, %v272
    %v778 = vmul.f32 %v775, %v273
    %v779 = vmul.f32 %v775, %v274
    %v780 = vadd.f32 %v771, %v776
    %v781 = vadd.f32 %v772, %v777
    %v782 = vadd.f32 %v773, %v778
    %v783 = vadd.f32 %v774, %v779
    %v784 = vstv %s162
    %v785 = vmul.f32 %v784, %v285
    %v786 = vmul.f32 %v784, %v286
    %v787 = vmul.f32 %v784, %v287
    %v788 = vmul.f32 %v784, %v288
    %v789 = vadd.f32 %v780, %v785
    %v790 = vadd.f32 %v781, %v786
    %v791 = vadd.f32 %v782, %v787
    %v792 = vadd.f32 %v783, %v788
    %v793 = vstv %s163
    %v794 = vmul.f32 %v793, %v299
    %v795 = vmul.f32 %v793, %v300
    %v796 = vmul.f32 %v793, %v301
    %v797 = vmul.f32 %v793, %v302
    %v798 = vadd.f32 %v789, %v794
    %v799 = vadd.f32 %v790, %v795
    %v800 = vadd.f32 %v791, %v796
    %v801 = vadd.f32 %v792, %v797
    %v802 = vstv %s164
    %v803 = vmul.f32 %v802, %v313
    %v804 = vmul.f32 %v802, %v314
    %v805 = vmul.f32 %v802, %v315
    %v806 = vmul.f32 %v802, %v316
    %v807 = vadd.f32 %v798, %v803
    %v808 = vadd.f32 %v799, %v804
    %v809 = vadd.f32 %v800, %v805
    %v810 = vadd.f32 %v801, %v806
    %v811 = vstv %s186
    %v812 = vadd.f32 %v807, %v811
    %v813 = vadd.f32 %v808, %v811
    %v814 = vadd.f32 %v809, %v811
    %v815 = vadd.f32 %v810, %v811
    %v816 = vmax.f32 %v812, 0.0
    %v817 = vmax.f32 %v813, 0.0
    %v818 = vmax.f32 %v814, 0.0
    %v819 = vmax.f32 %v815, 0.0
    %v820 = vstv %s194
    %v821 = vmul.f32 %v820, %v816
    %v822 = vmul.f32 %v820, %v817
    %v823 = vmul.f32 %v820, %v818
    %v824 = vmul.f32 %v820, %v819
    %v825 = vadd.f32 %v739, %v821
    %v826 = vadd.f32 %v740, %v822
    %v827 = vadd.f32 %v741, %v823
    %v828 = vadd.f32 %v742, %v824
    %v829 = vstv %s165
    %v830 = vmul.f32 %v829, %v215
    %v831 = vmul.f32 %v829, %v216
    %v832 = vmul.f32 %v829, %v217
    %v833 = vmul.f32 %v829, %v218
    %v834 = vstv %s166
    %v835 = vmul.f32 %v834, %v229
    %v836 = vmul.f32 %v834, %v230
    %v837 = vmul.f32 %v834, %v231
    %v838 = vmul.f32 %v834, %v232
    %v839 = vadd.f32 %v830, %v835
    %v840 = vadd.f32 %v831, %v836
    %v841 = vadd.f32 %v832, %v837
    %v842 = vadd.f32 %v833, %v838
    %v843 = vstv %s167
    %v844 = vmul.f32 %v843, %v243
    %v845 = vmul.f32 %v843, %v244
    %v846 = vmul.f32 %v843, %v245
    %v847 = vmul.f32 %v843, %v246
    %v848 = vadd.f32 %v839, %v844
    %v849 = vadd.f32 %v840, %v845
    %v850 = vadd.f32 %v841, %v846
    %v851 = vadd.f32 %v842, %v847
    %v852 = vstv %s168
    %v853 = vmul.f32 %v852, %v257
    %v854 = vmul.f32 %v852, %v258
    %v855 = vmul.f32 %v852, %v259
    %v856 = vmul.f32 %v852, %v260
    %v857 = vadd.f32 %v848, %v853
    %v858 = vadd.f32 %v849, %v854
    %v859 = vadd.f32 %v850, %v855
    %v860 = vadd.f32 %v851, %v856
    %v861 = vstv %s169
    %v862 = vmul.f32 %v861, %v271
    %v863 = vmul.f32 %v861, %v272
    %v864 = vmul.f32 %v861, %v273
    %v865 = vmul.f32 %v861, %v274
    %v866 = vadd.f32 %v857, %v862
    %v867 = vadd.f32 %v858, %v863
    %v868 = vadd.f32 %v859, %v864
    %v869 = vadd.f32 %v860, %v865
    %v870 = vstv %s170
    %v871 = vmul.f32 %v870, %v285
    %v872 = vmul.f32 %v870, %v286
    %v873 = vmul.f32 %v870, %v287
    %v874 = vmul.f32 %v870, %v288
    %v875 = vadd.f32 %v866, %v871
    %v876 = vadd.f32 %v867, %v872
    %v877 = vadd.f32 %v868, %v873
    %v878 = vadd.f32 %v869, %v874
    %v879 = vstv %s171
    %v880 = vmul.f32 %v879, %v299
    %v881 = vmul.f32 %v879, %v300
    %v882 = vmul.f32 %v879, %v301
    %v883 = vmul.f32 %v879, %v302
    %v884 = vadd.f32 %v875, %v880
    %v885 = vadd.f32 %v876, %v881
    %v886 = vadd.f32 %v877, %v882
    %v887 = vadd.f32 %v878, %v883
    %v888 = vstv %s172
    %v889 = vmul.f32 %v888, %v313
    %v890 = vmul.f32 %v888, %v314
    %v891 = vmul.f32 %v888, %v315
    %v892 = vmul.f32 %v888, %v316
    %v893 = vadd.f32 %v884, %v889
    %v894 = vadd.f32 %v885, %v890
    %v895 = vadd.f32 %v886, %v891
    %v896 = vadd.f32 %v887, %v892
    %v897 = vstv %s187
    %v898 = vadd.f32 %v893, %v897
    %v899 = vadd.f32 %v894, %v897
    %v900 = vadd.f32 %v895, %v897
    %v901 = vadd.f32 %v896, %v897
    %v902 = vmax.f32 %v898, 0.0
    %v903 = vmax.f32 %v899, 0.0
    %v904 = vmax.f32 %v900, 0.0
    %v905 = vmax.f32 %v901, 0.0
    %v906 = vstv %s195
    %v907 = vmul.f32 %v906, %v902
    %v908 = vmul.f32 %v906, %v903
    %v909 = vmul.f32 %v906, %v904
    %v910 = vmul.f32 %v906, %v905
    %v911 = vadd.f32 %v825, %v907
    %v912 = vadd.f32 %v826, %v908
    %v913 = vadd.f32 %v827, %v909
    %v914 = vadd.f32 %v828, %v910
    %v915 = vstv %s173
    %v916 = vmul.f32 %v915, %v215
    %v917 = vmul.f32 %v915, %v216
    %v918 = vmul.f32 %v915, %v217
    %v919 = vmul.f32 %v915, %v218
    %v920 = vstv %s174
    %v921 = vmul.f32 %v920, %v229
    %v922 = vmul.f32 %v920, %v230
    %v923 = vmul.f32 %v920, %v231
    %v924 = vmul.f32 %v920, %v232
    %v925 = vadd.f32 %v916, %v921
    %v926 = vadd.f32 %v917, %v922
    %v927 = vadd.f32 %v918, %v923
    %v928 = vadd.f32 %v919, %v924
    %v929 = vstv %s175
    %v930 = vmul.f32 %v929, %v243
    %v931 = vmul.f32 %v929, %v244
    %v932 = vmul.f32 %v929, %v245
    %v933 = vmul.f32 %v929, %v246
    %v934 = vadd.f32 %v925, %v930
    %v935 = vadd.f32 %v926, %v931
    %v936 = vadd.f32 %v927, %v932
    %v937 = vadd.f32 %v928, %v933
    %v938 = vstv %s176
    %v939 = vmul.f32 %v938, %v257
    %v940 = vmul.f32 %v938, %v258
    %v941 = vmul.f32 %v938, %v259
    %v942 = vmul.f32 %v938, %v260
    %v943 = vadd.f32 %v934, %v939
    %v944 = vadd.f32 %v935, %v940
    %v945 = vadd.f32 %v936, %v941
    %v946 = vadd.f32 %v937, %v942
    %v947 = vstv %s177
    %v948 = vmul.f32 %v947, %v271
    %v949 = vmul.f32 %v947, %v272
    %v950 = vmul.f32 %v947, %v273
    %v951 = vmul.f32 %v947, %v274
    %v952 = vadd.f32 %v943, %v948
    %v953 = vadd.f32 %v944, %v949
    %v954 = vadd.f32 %v945, %v950
    %v955 = vadd.f32 %v946, %v951
    %v956 = vstv %s178
    %v957 = vmul.f32 %v956, %v285
    %v958 = vmul.f32 %v956, %v286
    %v959 = vmul.f32 %v956, %v287
    %v960 = vmul.f32 %v956, %v288
    %v961 = vadd.f32 %v952, %v957
    %v962 = vadd.f32 %v953, %v958
    %v963 = vadd.f32 %v954, %v959
    %v964 = vadd.f32 %v955, %v960
    %v965 = vstv %s179
    %v966 = vmul.f32 %v965, %v299
    %v967 = vmul.f32 %v965, %v300
    %v968 = vmul.f32 %v965, %v301
    %v969 = vmul.f32 %v965, %v302
    %v970 = vadd.f32 %v961, %v966
    %v971 = vadd.f32 %v962, %v967
    %v972 = vadd.f32 %v963, %v968
    %v973 = vadd.f32 %v964, %v969
    %v974 = vstv %s180
    %v975 = vmul.f32 %v974, %v313
    %v976 = vmul.f32 %v974, %v314
    %v977 = vmul.f32 %v974, %v315
    %v978 = vmul.f32 %v974, %v316
    %v979 = vadd.f32 %v970, %v975
    %v980 = vadd.f32 %v971, %v976
    %v981 = vadd.f32 %v972, %v977
    %v982 = vadd.f32 %v973, %v978
    %v983 = vstv %s188
    %v984 = vadd.f32 %v979, %v983
    %v985 = vadd.f32 %v980, %v983
    %v986 = vadd.f32 %v981, %v983
    %v987 = vadd.f32 %v982, %v983
    %v988 = vmax.f32 %v984, 0.0
    %v989 = vmax.f32 %v985, 0.0
    %v990 = vmax.f32 %v986, 0.0
    %v991 = vmax.f32 %v987, 0.0
    %v992 = vstv %s196
    %v993 = vmul.f32 %v992, %v988
    %v994 = vmul.f32 %v992, %v989
    %v995 = vmul.f32 %v992, %v990
    %v996 = vmul.f32 %v992, %v991
    %v997 = vadd.f32 %v911, %v993
    %v998 = vadd.f32 %v912, %v994
    %v999 = vadd.f32 %v913, %v995
    %v1000 = vadd.f32 %v914, %v996
    %v1001 = vstv %s197
    %v1002 = vadd.f32 %v997, %v1001
    %v1003 = vadd.f32 %v998, %v1001
    %v1004 = vadd.f32 %v999, %v1001
    %v1005 = vadd.f32 %v1000, %v1001
    %s1006 = smul.addr %s198, 8
    %s1007 = scalar_lea.vmem [#allocation14], %s1006
    %1008 = vst [vmem:[%s1007] sm:$0xff] %v1002
    %1009 = vst [vmem:[%s1007 + $0x8] sm:$0xff] %v1003
    %1010 = vst [vmem:[%s1007 + $0x10] sm:$0xff] %v1004
    %1011 = vst [vmem:[%s1007 + $0x18] sm:$0xff] %v1005
    // Predicated region
    $region54: #{tpu_custom_call.1} parent=1 // pred_check
      _
    $region55: #{tpu_custom_call.1} parent=1 // pred_check_branch
      %1013 = sbr.rel (0) target = $region57
    $region56: #{tpu_custom_call.1} parent=1 // pred_region
      %1015 = vsyncadd [#allocation5], 0
      %s1017 = sshll.u32 [#allocation14], 4
      %s1018 = int_to_ptr.vmem [resolvable:$true] %s1017
      %s1019 = sshll.u32 %s7, 4
      %s1020 = int_to_ptr.hbm [resolvable:$true] %s1019
      %1022 = dma.vmem_to_hbm [thread:$0]  %s1018, 512, %s1020, [#allocation5]
    $region57: #{tpu_custom_call.1} parent=1 // pred_fallthru
      _
    // Predicated region
    $region58: #{tpu_custom_call.1} parent=1 // pred_check
      _
    $region59: #{tpu_custom_call.1} parent=1 // pred_check_branch
      %1024 = sbr.rel (0) target = $region61
    $region60: #{tpu_custom_call.1} parent=1 // pred_region
      %1026 = dma.done [#allocation5], 512
    $region61: #{tpu_custom_call.1} parent=1 // pred_fallthru
      _
    %1027 = vsyncpa [#allocation4], 1
    %1028 = vsyncpa [#allocation5], 1
    %1029 = vsyncpa [#allocation6], 1
    %1030 = vsyncpa [#allocation8], 1
    %1031 = vsyncpa [#allocation11], 1

</llo_original>
